<compile_context>
chip_gen: v7x
topology: tpu7x:2x2x1
jax: 0.10.0
libtpu: 0.0.40
codegen_flags: <defaults>
</compile_context>

<pallas_src>
import functools

import jax
import jax.numpy as jnp
from jax import lax
from jax.experimental import pallas as pl
from jax.experimental.pallas import tpu as pltpu


def _lstm_fused_kernel(x_ref, wih_ref, whh_ref, b_ref, wout_ref, bout_ref,
                       y_ref, gx_ref,
                       *, seq_len, batch, hidden, unroll):
    """x_ref: (T*B, I); wih_ref: (I, 4H); whh_ref: (H, 4H); b_ref: (1, 4H);
    wout_ref: (1, H); bout_ref: SMEM (1, 1); y_ref: (B, 1);
    gx_ref: (T, B, 4H) scratch.  B padded to 8 sublanes, H padded to 128 lanes."""
    T, B, H = seq_len, batch, hidden

    # ---- Hoisted input projection: no time dependency, ONE batched matmul ----
    gx = jnp.dot(x_ref[...], wih_ref[...],
                 preferred_element_type=jnp.float32) + b_ref[...]
    # (T*B, 4H) -> (T, B, 4H): sublane-axis split only, last dim unchanged.
    gx_ref[...] = gx.reshape(T, B, 4 * H)

    # ---- Serial recurrence over time, fully inside one kernel invocation ----
    # h/c live in registers (fori_loop carry); whh is streamed from VMEM into
    # the MXU each step rather than being held live across the unrolled loop.
    def step(t, carry):
        h_prev, c_prev = carry
        gates = gx_ref[t] + jnp.dot(h_prev, whh_ref[...],
                                    preferred_element_type=jnp.float32)
        # PyTorch gate order: i, f, g, o.  Slices start on 128-lane boundaries
        # because H is padded to a multiple of 128.
        i_g = jax.nn.sigmoid(gates[:, 0 * H:1 * H])
        f_g = jax.nn.sigmoid(gates[:, 1 * H:2 * H])
        g_g = jnp.tanh(gates[:, 2 * H:3 * H])
        o_g = jax.nn.sigmoid(gates[:, 3 * H:4 * H])
        c_new = f_g * c_prev + i_g * g_g
        h_new = o_g * jnp.tanh(c_new)
        return (h_new, c_new)

    h0 = jnp.zeros((B, H), jnp.float32)
    c0 = jnp.zeros((B, H), jnp.float32)
    h_last, _ = lax.fori_loop(0, T, step, (h0, c0), unroll=unroll)

    # ---- Head: y = h_T . weights_mu[:-1] + weights_mu[-1] ----
    # VPU multiply + lane reduce (XLU); avoids an N=1 MXU matmul in the tail.
    # TODO(synk): emit lane-major (1, B) output if batch ever scales (vst.msk).
    y_ref[...] = (jnp.sum(h_last * wout_ref[...], axis=-1, keepdims=True)
                  + bout_ref[0, 0])


def lstm_not_correlated_dropout_forward(x, w_ih, w_hh, b_ih, b_hh, weights_mu):
    """x: (T, B, I) f32.  Returns y_pred of shape (B,) (training+pretraining path)."""
    T, B, I = x.shape
    H = w_hh.shape[1]
    assert w_ih.shape == (4 * H, I)
    assert w_hh.shape == (4 * H, H)
    assert weights_mu.shape == (H + 1,)

    f32 = jnp.float32
    B_pad = ((B + 7) // 8) * 8            # f32 sublane multiple
    H_pad = ((H + 127) // 128) * 128      # gate slices land on 128-lane boundaries

    def pad_gate_weight(w):
        # (4H, K) -> transposed (K, 4*H_pad) with each gate zero-padded to H_pad
        # lanes.  Zero padding keeps padded hidden lanes of c/h exactly 0
        # (sigmoid(0)*tanh(0) = 0) -- keep this invariant if refactoring.
        K = w.shape[1]
        w4 = w.reshape(4, H, K).astype(f32)
        w4 = jnp.pad(w4, ((0, 0), (0, H_pad - H), (0, 0)))
        return jnp.transpose(w4, (2, 0, 1)).reshape(K, 4 * H_pad)

    wih_t = pad_gate_weight(w_ih)                                     # (I, 4*H_pad)
    whh_t = jnp.pad(pad_gate_weight(w_hh), ((0, H_pad - H), (0, 0)))  # (H_pad, 4*H_pad)

    bias = (b_ih + b_hh).astype(f32).reshape(4, H)
    bias = jnp.pad(bias, ((0, 0), (0, H_pad - H))).reshape(1, 4 * H_pad)

    w_out = jnp.pad(weights_mu[:-1].astype(f32), (0, H_pad - H)).reshape(1, H_pad)
    b_out = weights_mu[-1].astype(f32).reshape(1, 1)

    x_p = jnp.pad(x.astype(f32), ((0, 0), (0, B_pad - B), (0, 0)))    # (T, B_pad, I)
    x2d = x_p.reshape(T * B_pad, I)

    unroll = True if T <= 16 else 8
    kernel = functools.partial(_lstm_fused_kernel,
                               seq_len=T, batch=B_pad, hidden=H_pad,
                               unroll=unroll)

    y = pl.pallas_call(
        kernel,
        out_shape=jax.ShapeDtypeStruct((B_pad, 1), f32),
        in_specs=[
            pl.BlockSpec(memory_space=pltpu.MemorySpace.VMEM),   # x (all time steps)
            pl.BlockSpec(memory_space=pltpu.MemorySpace.VMEM),   # W_ih^T (gate-padded)
            pl.BlockSpec(memory_space=pltpu.MemorySpace.VMEM),   # W_hh^T (gate-padded)
            pl.BlockSpec(memory_space=pltpu.MemorySpace.VMEM),   # folded bias
            pl.BlockSpec(memory_space=pltpu.MemorySpace.VMEM),   # head weights row
            pl.BlockSpec(memory_space=pltpu.MemorySpace.SMEM),   # head bias scalar
        ],
        out_specs=pl.BlockSpec(memory_space=pltpu.MemorySpace.VMEM),
        scratch_shapes=[
            pltpu.VMEM((T, B_pad, 4 * H_pad), f32),   # hoisted x-projection gates
        ],
    )(x2d, wih_t, whh_t, bias, w_out, b_out)

    return y[:B, 0]   # .view(-1) in the PyTorch module (drop batch padding)


def _reference_forward(x, w_ih, w_hh, b_ih, b_hh, weights_mu):
    """Pure-JAX reference (mirrors torch.nn.LSTM + F.linear)."""
    T, B, I = x.shape
    H = w_hh.shape[1]
    h = jnp.zeros((B, H), jnp.float32)
    c = jnp.zeros((B, H), jnp.float32)
    for t in range(T):
        gates = x[t] @ w_ih.T + b_ih + h @ w_hh.T + b_hh
        i_g = jax.nn.sigmoid(gates[:, 0 * H:1 * H])
        f_g = jax.nn.sigmoid(gates[:, 1 * H:2 * H])
        g_g = jnp.tanh(gates[:, 2 * H:3 * H])
        o_g = jax.nn.sigmoid(gates[:, 3 * H:4 * H])
        c = f_g * c + i_g * g_g
        h = o_g * jnp.tanh(c)
    return h @ weights_mu[:-1] + weights_mu[-1]


if __name__ == "__main__":
    # Small shapes consistent with the module: seq=8, batch=2, input_dim=8, hidden=32.
    T, B, I, H = 8, 2, 8, 32

    key = jax.random.PRNGKey(0)
    kx, k1, k2, k3, k4, k5 = jax.random.split(key, 6)

    x = jax.random.normal(kx, (T, B, I), dtype=jnp.float32)

    # Deterministic parameter init (PyTorch LSTM uses U(-1/sqrt(H), 1/sqrt(H))).
    bound = 1.0 / jnp.sqrt(jnp.float32(H))
    w_ih = jax.random.uniform(k1, (4 * H, I), jnp.float32, -bound, bound)
    w_hh = jax.random.uniform(k2, (4 * H, H), jnp.float32, -bound, bound)
    b_ih = jax.random.uniform(k3, (4 * H,), jnp.float32, -bound, bound)
    b_hh = jax.random.uniform(k4, (4 * H,), jnp.float32, -bound, bound)
    # weights_mu is zeros in the module __init__; use small random values here
    # so the linear head is exercised non-trivially (still deterministic).
    weights_mu = 0.1 * jax.random.normal(k5, (H + 1,), dtype=jnp.float32)

    y_pred = lstm_not_correlated_dropout_forward(x, w_ih, w_hh, b_ih, b_hh,
                                                 weights_mu)
    y_pred = jax.block_until_ready(y_pred)

    y_ref = _reference_forward(x, w_ih, w_hh, b_ih, b_hh, weights_mu)
    assert y_pred.shape == (B,)
    assert jnp.allclose(y_pred, y_ref, atol=1e-5, rtol=1e-5)

    print("KERNEL_OK")
</pallas_src>

<mosaic_0001>
module attributes {stable_mosaic.version = 11 : i64} {
  func.func @_lstm_fused_kernel(%arg0: memref<64x8xf32, #tpu.memory_space<vmem>>, %arg1: memref<8x512xf32, #tpu.memory_space<vmem>>, %arg2: memref<128x512xf32, #tpu.memory_space<vmem>>, %arg3: memref<1x512xf32, #tpu.memory_space<vmem>>, %arg4: memref<1x128xf32, #tpu.memory_space<vmem>>, %arg5: memref<1x1xf32, #tpu.memory_space<smem>>, %arg6: memref<8x1xf32, #tpu.memory_space<vmem>>, %arg7: memref<8x8x512xf32, #tpu.memory_space<vmem>>) attributes {dimension_semantics = [], scalar_prefetch = 0 : i64, scratch_operands = 1 : i64, tpu.core_type = #tpu.core_type<tc>} {
    %c0 = arith.constant 0 : index
    %c0_0 = arith.constant 0 : index
    %0 = vector.load %arg0[%c0, %c0_0] : memref<64x8xf32, #tpu.memory_space<vmem>>, vector<64x8xf32>
    %c0_1 = arith.constant 0 : index
    %c0_2 = arith.constant 0 : index
    %1 = vector.load %arg1[%c0_1, %c0_2] : memref<8x512xf32, #tpu.memory_space<vmem>>, vector<8x512xf32>
    %cst = arith.constant dense<0.000000e+00> : vector<64x512xf32>
    %2 = tpu.matmul %0, %1, %cst {dimension_numbers = #tpu.dot_dimension_numbers<[1], [0], [0], [1], [0, 0, 1, 1], [], []>} : vector<64x8xf32>, vector<8x512xf32>, vector<64x512xf32> -> vector<64x512xf32>
    %c0_3 = arith.constant 0 : index
    %c0_4 = arith.constant 0 : index
    %3 = vector.load %arg3[%c0_3, %c0_4] : memref<1x512xf32, #tpu.memory_space<vmem>>, vector<1x512xf32>
    %4 = vector.broadcast %3 : vector<1x512xf32> to vector<64x512xf32>
    %5 = arith.addf %2, %4 : vector<64x512xf32>
    %6 = vector.shape_cast %5 : vector<64x512xf32> to vector<8x8x512xf32>
    %c0_5 = arith.constant 0 : index
    %c0_6 = arith.constant 0 : index
    %c0_7 = arith.constant 0 : index
    %7 = vector.load %arg7[%c0_5, %c0_6, %c0_7] : memref<8x8x512xf32, #tpu.memory_space<vmem>>, vector<8x8x512xf32>
    tpu.vector_store %arg7[%c0_5, %c0_6, %c0_7], %6 {strides = array<i32>} : memref<8x8x512xf32, #tpu.memory_space<vmem>>, vector<8x8x512xf32>,
    %cst_8 = arith.constant 0.000000e+00 : f32
    %8 = vector.broadcast %cst_8 : f32 to vector<8x128xf32>
    %cst_9 = arith.constant 0.000000e+00 : f32
    %9 = vector.broadcast %cst_9 : f32 to vector<8x128xf32>
    %c0_i32 = arith.constant 0 : i32
    %10 = arith.index_cast %c0_i32 : i32 to index
    %c0_10 = arith.constant 0 : index
    %c0_11 = arith.constant 0 : index
    %11 = vector.load %arg7[%10, %c0_10, %c0_11] : memref<8x8x512xf32, #tpu.memory_space<vmem>>, vector<1x8x512xf32>
    %12 = vector.shape_cast %11 : vector<1x8x512xf32> to vector<8x512xf32>
    %c0_12 = arith.constant 0 : index
    %c0_13 = arith.constant 0 : index
    %13 = vector.load %arg2[%c0_12, %c0_13] : memref<128x512xf32, #tpu.memory_space<vmem>>, vector<128x512xf32>
    %cst_14 = arith.constant dense<0.000000e+00> : vector<8x512xf32>
    %14 = tpu.matmul %8, %13, %cst_14 {dimension_numbers = #tpu.dot_dimension_numbers<[1], [0], [0], [1], [0, 0, 1, 1], [], []>} : vector<8x128xf32>, vector<128x512xf32>, vector<8x512xf32> -> vector<8x512xf32>
    %15 = arith.addf %12, %14 : vector<8x512xf32>
    %16 = vector.extract_strided_slice %15 {offsets = [0, 0], sizes = [8, 128], strides = [1, 1]} : vector<8x512xf32> to vector<8x128xf32>
    %17 = arith.negf %16 : vector<8x128xf32>
    %18 = math.exp %17 : vector<8x128xf32>
    %cst_15 = arith.constant 1.000000e+00 : f32
    %19 = vector.broadcast %cst_15 : f32 to vector<8x128xf32>
    %20 = arith.addf %19, %18 : vector<8x128xf32>
    %21 = arith.divf %19, %20 : vector<8x128xf32>
    %22 = vector.extract_strided_slice %15 {offsets = [0, 128], sizes = [8, 128], strides = [1, 1]} : vector<8x512xf32> to vector<8x128xf32>
    %23 = arith.negf %22 : vector<8x128xf32>
    %24 = math.exp %23 : vector<8x128xf32>
    %cst_16 = arith.constant 1.000000e+00 : f32
    %25 = vector.broadcast %cst_16 : f32 to vector<8x128xf32>
    %26 = arith.addf %25, %24 : vector<8x128xf32>
    %27 = arith.divf %25, %26 : vector<8x128xf32>
    %28 = vector.extract_strided_slice %15 {offsets = [0, 256], sizes = [8, 128], strides = [1, 1]} : vector<8x512xf32> to vector<8x128xf32>
    %29 = math.tanh %28 : vector<8x128xf32>
    %30 = vector.extract_strided_slice %15 {offsets = [0, 384], sizes = [8, 128], strides = [1, 1]} : vector<8x512xf32> to vector<8x128xf32>
    %31 = arith.negf %30 : vector<8x128xf32>
    %32 = math.exp %31 : vector<8x128xf32>
    %cst_17 = arith.constant 1.000000e+00 : f32
    %33 = vector.broadcast %cst_17 : f32 to vector<8x128xf32>
    %34 = arith.addf %33, %32 : vector<8x128xf32>
    %35 = arith.divf %33, %34 : vector<8x128xf32>
    %36 = arith.mulf %27, %9 : vector<8x128xf32>
    %37 = arith.mulf %21, %29 : vector<8x128xf32>
    %38 = arith.addf %36, %37 : vector<8x128xf32>
    %39 = math.tanh %38 : vector<8x128xf32>
    %40 = arith.mulf %35, %39 : vector<8x128xf32>
    %c1_i32 = arith.constant 1 : i32
    %41 = arith.index_cast %c1_i32 : i32 to index
    %c0_18 = arith.constant 0 : index
    %c0_19 = arith.constant 0 : index
    %42 = vector.load %arg7[%41, %c0_18, %c0_19] : memref<8x8x512xf32, #tpu.memory_space<vmem>>, vector<1x8x512xf32>
    %43 = vector.shape_cast %42 : vector<1x8x512xf32> to vector<8x512xf32>
    %c0_20 = arith.constant 0 : index
    %c0_21 = arith.constant 0 : index
    %44 = vector.load %arg2[%c0_20, %c0_21] : memref<128x512xf32, #tpu.memory_space<vmem>>, vector<128x512xf32>
    %cst_22 = arith.constant dense<0.000000e+00> : vector<8x512xf32>
    %45 = tpu.matmul %40, %44, %cst_22 {dimension_numbers = #tpu.dot_dimension_numbers<[1], [0], [0], [1], [0, 0, 1, 1], [], []>} : vector<8x128xf32>, vector<128x512xf32>, vector<8x512xf32> -> vector<8x512xf32>
    %46 = arith.addf %43, %45 : vector<8x512xf32>
    %47 = vector.extract_strided_slice %46 {offsets = [0, 0], sizes = [8, 128], strides = [1, 1]} : vector<8x512xf32> to vector<8x128xf32>
    %48 = arith.negf %47 : vector<8x128xf32>
    %49 = math.exp %48 : vector<8x128xf32>
    %cst_23 = arith.constant 1.000000e+00 : f32
    %50 = vector.broadcast %cst_23 : f32 to vector<8x128xf32>
    %51 = arith.addf %50, %49 : vector<8x128xf32>
    %52 = arith.divf %50, %51 : vector<8x128xf32>
    %53 = vector.extract_strided_slice %46 {offsets = [0, 128], sizes = [8, 128], strides = [1, 1]} : vector<8x512xf32> to vector<8x128xf32>
    %54 = arith.negf %53 : vector<8x128xf32>
    %55 = math.exp %54 : vector<8x128xf32>
    %cst_24 = arith.constant 1.000000e+00 : f32
    %56 = vector.broadcast %cst_24 : f32 to vector<8x128xf32>
    %57 = arith.addf %56, %55 : vector<8x128xf32>
    %58 = arith.divf %56, %57 : vector<8x128xf32>
    %59 = vector.extract_strided_slice %46 {offsets = [0, 256], sizes = [8, 128], strides = [1, 1]} : vector<8x512xf32> to vector<8x128xf32>
    %60 = math.tanh %59 : vector<8x128xf32>
    %61 = vector.extract_strided_slice %46 {offsets = [0, 384], sizes = [8, 128], strides = [1, 1]} : vector<8x512xf32> to vector<8x128xf32>
    %62 = arith.negf %61 : vector<8x128xf32>
    %63 = math.exp %62 : vector<8x128xf32>
    %cst_25 = arith.constant 1.000000e+00 : f32
    %64 = vector.broadcast %cst_25 : f32 to vector<8x128xf32>
    %65 = arith.addf %64, %63 : vector<8x128xf32>
    %66 = arith.divf %64, %65 : vector<8x128xf32>
    %67 = arith.mulf %58, %38 : vector<8x128xf32>
    %68 = arith.mulf %52, %60 : vector<8x128xf32>
    %69 = arith.addf %67, %68 : vector<8x128xf32>
    %70 = math.tanh %69 : vector<8x128xf32>
    %71 = arith.mulf %66, %70 : vector<8x128xf32>
    %c2_i32 = arith.constant 2 : i32
    %72 = arith.index_cast %c2_i32 : i32 to index
    %c0_26 = arith.constant 0 : index
    %c0_27 = arith.constant 0 : index
    %73 = vector.load %arg7[%72, %c0_26, %c0_27] : memref<8x8x512xf32, #tpu.memory_space<vmem>>, vector<1x8x512xf32>
    %74 = vector.shape_cast %73 : vector<1x8x512xf32> to vector<8x512xf32>
    %c0_28 = arith.constant 0 : index
    %c0_29 = arith.constant 0 : index
    %75 = vector.load %arg2[%c0_28, %c0_29] : memref<128x512xf32, #tpu.memory_space<vmem>>, vector<128x512xf32>
    %cst_30 = arith.constant dense<0.000000e+00> : vector<8x512xf32>
    %76 = tpu.matmul %71, %75, %cst_30 {dimension_numbers = #tpu.dot_dimension_numbers<[1], [0], [0], [1], [0, 0, 1, 1], [], []>} : vector<8x128xf32>, vector<128x512xf32>, vector<8x512xf32> -> vector<8x512xf32>
    %77 = arith.addf %74, %76 : vector<8x512xf32>
    %78 = vector.extract_strided_slice %77 {offsets = [0, 0], sizes = [8, 128], strides = [1, 1]} : vector<8x512xf32> to vector<8x128xf32>
    %79 = arith.negf %78 : vector<8x128xf32>
    %80 = math.exp %79 : vector<8x128xf32>
    %cst_31 = arith.constant 1.000000e+00 : f32
    %81 = vector.broadcast %cst_31 : f32 to vector<8x128xf32>
    %82 = arith.addf %81, %80 : vector<8x128xf32>
    %83 = arith.divf %81, %82 : vector<8x128xf32>
    %84 = vector.extract_strided_slice %77 {offsets = [0, 128], sizes = [8, 128], strides = [1, 1]} : vector<8x512xf32> to vector<8x128xf32>
    %85 = arith.negf %84 : vector<8x128xf32>
    %86 = math.exp %85 : vector<8x128xf32>
    %cst_32 = arith.constant 1.000000e+00 : f32
    %87 = vector.broadcast %cst_32 : f32 to vector<8x128xf32>
    %88 = arith.addf %87, %86 : vector<8x128xf32>
    %89 = arith.divf %87, %88 : vector<8x128xf32>
    %90 = vector.extract_strided_slice %77 {offsets = [0, 256], sizes = [8, 128], strides = [1, 1]} : vector<8x512xf32> to vector<8x128xf32>
    %91 = math.tanh %90 : vector<8x128xf32>
    %92 = vector.extract_strided_slice %77 {offsets = [0, 384], sizes = [8, 128], strides = [1, 1]} : vector<8x512xf32> to vector<8x128xf32>
    %93 = arith.negf %92 : vector<8x128xf32>
    %94 = math.exp %93 : vector<8x128xf32>
    %cst_33 = arith.constant 1.000000e+00 : f32
    %95 = vector.broadcast %cst_33 : f32 to vector<8x128xf32>
    %96 = arith.addf %95, %94 : vector<8x128xf32>
    %97 = arith.divf %95, %96 : vector<8x128xf32>
    %98 = arith.mulf %89, %69 : vector<8x128xf32>
    %99 = arith.mulf %83, %91 : vector<8x128xf32>
    %100 = arith.addf %98, %99 : vector<8x128xf32>
    %101 = math.tanh %100 : vector<8x128xf32>
    %102 = arith.mulf %97, %101 : vector<8x128xf32>
    %c3_i32 = arith.constant 3 : i32
    %103 = arith.index_cast %c3_i32 : i32 to index
    %c0_34 = arith.constant 0 : index
    %c0_35 = arith.constant 0 : index
    %104 = vector.load %arg7[%103, %c0_34, %c0_35] : memref<8x8x512xf32, #tpu.memory_space<vmem>>, vector<1x8x512xf32>
    %105 = vector.shape_cast %104 : vector<1x8x512xf32> to vector<8x512xf32>
    %c0_36 = arith.constant 0 : index
    %c0_37 = arith.constant 0 : index
    %106 = vector.load %arg2[%c0_36, %c0_37] : memref<128x512xf32, #tpu.memory_space<vmem>>, vector<128x512xf32>
    %cst_38 = arith.constant dense<0.000000e+00> : vector<8x512xf32>
    %107 = tpu.matmul %102, %106, %cst_38 {dimension_numbers = #tpu.dot_dimension_numbers<[1], [0], [0], [1], [0, 0, 1, 1], [], []>} : vector<8x128xf32>, vector<128x512xf32>, vector<8x512xf32> -> vector<8x512xf32>
    %108 = arith.addf %105, %107 : vector<8x512xf32>
    %109 = vector.extract_strided_slice %108 {offsets = [0, 0], sizes = [8, 128], strides = [1, 1]} : vector<8x512xf32> to vector<8x128xf32>
    %110 = arith.negf %109 : vector<8x128xf32>
    %111 = math.exp %110 : vector<8x128xf32>
    %cst_39 = arith.constant 1.000000e+00 : f32
    %112 = vector.broadcast %cst_39 : f32 to vector<8x128xf32>
    %113 = arith.addf %112, %111 : vector<8x128xf32>
    %114 = arith.divf %112, %113 : vector<8x128xf32>
    %115 = vector.extract_strided_slice %108 {offsets = [0, 128], sizes = [8, 128], strides = [1, 1]} : vector<8x512xf32> to vector<8x128xf32>
    %116 = arith.negf %115 : vector<8x128xf32>
    %117 = math.exp %116 : vector<8x128xf32>
    %cst_40 = arith.constant 1.000000e+00 : f32
    %118 = vector.broadcast %cst_40 : f32 to vector<8x128xf32>
    %119 = arith.addf %118, %117 : vector<8x128xf32>
    %120 = arith.divf %118, %119 : vector<8x128xf32>
    %121 = vector.extract_strided_slice %108 {offsets = [0, 256], sizes = [8, 128], strides = [1, 1]} : vector<8x512xf32> to vector<8x128xf32>
    %122 = math.tanh %121 : vector<8x128xf32>
    %123 = vector.extract_strided_slice %108 {offsets = [0, 384], sizes = [8, 128], strides = [1, 1]} : vector<8x512xf32> to vector<8x128xf32>
    %124 = arith.negf %123 : vector<8x128xf32>
    %125 = math.exp %124 : vector<8x128xf32>
    %cst_41 = arith.constant 1.000000e+00 : f32
    %126 = vector.broadcast %cst_41 : f32 to vector<8x128xf32>
    %127 = arith.addf %126, %125 : vector<8x128xf32>
    %128 = arith.divf %126, %127 : vector<8x128xf32>
    %129 = arith.mulf %120, %100 : vector<8x128xf32>
    %130 = arith.mulf %114, %122 : vector<8x128xf32>
    %131 = arith.addf %129, %130 : vector<8x128xf32>
    %132 = math.tanh %131 : vector<8x128xf32>
    %133 = arith.mulf %128, %132 : vector<8x128xf32>
    %c4_i32 = arith.constant 4 : i32
    %134 = arith.index_cast %c4_i32 : i32 to index
    %c0_42 = arith.constant 0 : index
    %c0_43 = arith.constant 0 : index
    %135 = vector.load %arg7[%134, %c0_42, %c0_43] : memref<8x8x512xf32, #tpu.memory_space<vmem>>, vector<1x8x512xf32>
    %136 = vector.shape_cast %135 : vector<1x8x512xf32> to vector<8x512xf32>
    %c0_44 = arith.constant 0 : index
    %c0_45 = arith.constant 0 : index
    %137 = vector.load %arg2[%c0_44, %c0_45] : memref<128x512xf32, #tpu.memory_space<vmem>>, vector<128x512xf32>
    %cst_46 = arith.constant dense<0.000000e+00> : vector<8x512xf32>
    %138 = tpu.matmul %133, %137, %cst_46 {dimension_numbers = #tpu.dot_dimension_numbers<[1], [0], [0], [1], [0, 0, 1, 1], [], []>} : vector<8x128xf32>, vector<128x512xf32>, vector<8x512xf32> -> vector<8x512xf32>
    %139 = arith.addf %136, %138 : vector<8x512xf32>
    %140 = vector.extract_strided_slice %139 {offsets = [0, 0], sizes = [8, 128], strides = [1, 1]} : vector<8x512xf32> to vector<8x128xf32>
    %141 = arith.negf %140 : vector<8x128xf32>
    %142 = math.exp %141 : vector<8x128xf32>
    %cst_47 = arith.constant 1.000000e+00 : f32
    %143 = vector.broadcast %cst_47 : f32 to vector<8x128xf32>
    %144 = arith.addf %143, %142 : vector<8x128xf32>
    %145 = arith.divf %143, %144 : vector<8x128xf32>
    %146 = vector.extract_strided_slice %139 {offsets = [0, 128], sizes = [8, 128], strides = [1, 1]} : vector<8x512xf32> to vector<8x128xf32>
    %147 = arith.negf %146 : vector<8x128xf32>
    %148 = math.exp %147 : vector<8x128xf32>
    %cst_48 = arith.constant 1.000000e+00 : f32
    %149 = vector.broadcast %cst_48 : f32 to vector<8x128xf32>
    %150 = arith.addf %149, %148 : vector<8x128xf32>
    %151 = arith.divf %149, %150 : vector<8x128xf32>
    %152 = vector.extract_strided_slice %139 {offsets = [0, 256], sizes = [8, 128], strides = [1, 1]} : vector<8x512xf32> to vector<8x128xf32>
    %153 = math.tanh %152 : vector<8x128xf32>
    %154 = vector.extract_strided_slice %139 {offsets = [0, 384], sizes = [8, 128], strides = [1, 1]} : vector<8x512xf32> to vector<8x128xf32>
    %155 = arith.negf %154 : vector<8x128xf32>
    %156 = math.exp %155 : vector<8x128xf32>
    %cst_49 = arith.constant 1.000000e+00 : f32
    %157 = vector.broadcast %cst_49 : f32 to vector<8x128xf32>
    %158 = arith.addf %157, %156 : vector<8x128xf32>
    %159 = arith.divf %157, %158 : vector<8x128xf32>
    %160 = arith.mulf %151, %131 : vector<8x128xf32>
    %161 = arith.mulf %145, %153 : vector<8x128xf32>
    %162 = arith.addf %160, %161 : vector<8x128xf32>
    %163 = math.tanh %162 : vector<8x128xf32>
    %164 = arith.mulf %159, %163 : vector<8x128xf32>
    %c5_i32 = arith.constant 5 : i32
    %165 = arith.index_cast %c5_i32 : i32 to index
    %c0_50 = arith.constant 0 : index
    %c0_51 = arith.constant 0 : index
    %166 = vector.load %arg7[%165, %c0_50, %c0_51] : memref<8x8x512xf32, #tpu.memory_space<vmem>>, vector<1x8x512xf32>
    %167 = vector.shape_cast %166 : vector<1x8x512xf32> to vector<8x512xf32>
    %c0_52 = arith.constant 0 : index
    %c0_53 = arith.constant 0 : index
    %168 = vector.load %arg2[%c0_52, %c0_53] : memref<128x512xf32, #tpu.memory_space<vmem>>, vector<128x512xf32>
    %cst_54 = arith.constant dense<0.000000e+00> : vector<8x512xf32>
    %169 = tpu.matmul %164, %168, %cst_54 {dimension_numbers = #tpu.dot_dimension_numbers<[1], [0], [0], [1], [0, 0, 1, 1], [], []>} : vector<8x128xf32>, vector<128x512xf32>, vector<8x512xf32> -> vector<8x512xf32>
    %170 = arith.addf %167, %169 : vector<8x512xf32>
    %171 = vector.extract_strided_slice %170 {offsets = [0, 0], sizes = [8, 128], strides = [1, 1]} : vector<8x512xf32> to vector<8x128xf32>
    %172 = arith.negf %171 : vector<8x128xf32>
    %173 = math.exp %172 : vector<8x128xf32>
    %cst_55 = arith.constant 1.000000e+00 : f32
    %174 = vector.broadcast %cst_55 : f32 to vector<8x128xf32>
    %175 = arith.addf %174, %173 : vector<8x128xf32>
    %176 = arith.divf %174, %175 : vector<8x128xf32>
    %177 = vector.extract_strided_slice %170 {offsets = [0, 128], sizes = [8, 128], strides = [1, 1]} : vector<8x512xf32> to vector<8x128xf32>
    %178 = arith.negf %177 : vector<8x128xf32>
    %179 = math.exp %178 : vector<8x128xf32>
    %cst_56 = arith.constant 1.000000e+00 : f32
    %180 = vector.broadcast %cst_56 : f32 to vector<8x128xf32>
    %181 = arith.addf %180, %179 : vector<8x128xf32>
    %182 = arith.divf %180, %181 : vector<8x128xf32>
    %183 = vector.extract_strided_slice %170 {offsets = [0, 256], sizes = [8, 128], strides = [1, 1]} : vector<8x512xf32> to vector<8x128xf32>
    %184 = math.tanh %183 : vector<8x128xf32>
    %185 = vector.extract_strided_slice %170 {offsets = [0, 384], sizes = [8, 128], strides = [1, 1]} : vector<8x512xf32> to vector<8x128xf32>
    %186 = arith.negf %185 : vector<8x128xf32>
    %187 = math.exp %186 : vector<8x128xf32>
    %cst_57 = arith.constant 1.000000e+00 : f32
    %188 = vector.broadcast %cst_57 : f32 to vector<8x128xf32>
    %189 = arith.addf %188, %187 : vector<8x128xf32>
    %190 = arith.divf %188, %189 : vector<8x128xf32>
    %191 = arith.mulf %182, %162 : vector<8x128xf32>
    %192 = arith.mulf %176, %184 : vector<8x128xf32>
    %193 = arith.addf %191, %192 : vector<8x128xf32>
    %194 = math.tanh %193 : vector<8x128xf32>
    %195 = arith.mulf %190, %194 : vector<8x128xf32>
    %c6_i32 = arith.constant 6 : i32
    %196 = arith.index_cast %c6_i32 : i32 to index
    %c0_58 = arith.constant 0 : index
    %c0_59 = arith.constant 0 : index
    %197 = vector.load %arg7[%196, %c0_58, %c0_59] : memref<8x8x512xf32, #tpu.memory_space<vmem>>, vector<1x8x512xf32>
    %198 = vector.shape_cast %197 : vector<1x8x512xf32> to vector<8x512xf32>
    %c0_60 = arith.constant 0 : index
    %c0_61 = arith.constant 0 : index
    %199 = vector.load %arg2[%c0_60, %c0_61] : memref<128x512xf32, #tpu.memory_space<vmem>>, vector<128x512xf32>
    %cst_62 = arith.constant dense<0.000000e+00> : vector<8x512xf32>
    %200 = tpu.matmul %195, %199, %cst_62 {dimension_numbers = #tpu.dot_dimension_numbers<[1], [0], [0], [1], [0, 0, 1, 1], [], []>} : vector<8x128xf32>, vector<128x512xf32>, vector<8x512xf32> -> vector<8x512xf32>
    %201 = arith.addf %198, %200 : vector<8x512xf32>
    %202 = vector.extract_strided_slice %201 {offsets = [0, 0], sizes = [8, 128], strides = [1, 1]} : vector<8x512xf32> to vector<8x128xf32>
    %203 = arith.negf %202 : vector<8x128xf32>
    %204 = math.exp %203 : vector<8x128xf32>
    %cst_63 = arith.constant 1.000000e+00 : f32
    %205 = vector.broadcast %cst_63 : f32 to vector<8x128xf32>
    %206 = arith.addf %205, %204 : vector<8x128xf32>
    %207 = arith.divf %205, %206 : vector<8x128xf32>
    %208 = vector.extract_strided_slice %201 {offsets = [0, 128], sizes = [8, 128], strides = [1, 1]} : vector<8x512xf32> to vector<8x128xf32>
    %209 = arith.negf %208 : vector<8x128xf32>
    %210 = math.exp %209 : vector<8x128xf32>
    %cst_64 = arith.constant 1.000000e+00 : f32
    %211 = vector.broadcast %cst_64 : f32 to vector<8x128xf32>
    %212 = arith.addf %211, %210 : vector<8x128xf32>
    %213 = arith.divf %211, %212 : vector<8x128xf32>
    %214 = vector.extract_strided_slice %201 {offsets = [0, 256], sizes = [8, 128], strides = [1, 1]} : vector<8x512xf32> to vector<8x128xf32>
    %215 = math.tanh %214 : vector<8x128xf32>
    %216 = vector.extract_strided_slice %201 {offsets = [0, 384], sizes = [8, 128], strides = [1, 1]} : vector<8x512xf32> to vector<8x128xf32>
    %217 = arith.negf %216 : vector<8x128xf32>
    %218 = math.exp %217 : vector<8x128xf32>
    %cst_65 = arith.constant 1.000000e+00 : f32
    %219 = vector.broadcast %cst_65 : f32 to vector<8x128xf32>
    %220 = arith.addf %219, %218 : vector<8x128xf32>
    %221 = arith.divf %219, %220 : vector<8x128xf32>
    %222 = arith.mulf %213, %193 : vector<8x128xf32>
    %223 = arith.mulf %207, %215 : vector<8x128xf32>
    %224 = arith.addf %222, %223 : vector<8x128xf32>
    %225 = math.tanh %224 : vector<8x128xf32>
    %226 = arith.mulf %221, %225 : vector<8x128xf32>
    %c7_i32 = arith.constant 7 : i32
    %227 = arith.index_cast %c7_i32 : i32 to index
    %c0_66 = arith.constant 0 : index
    %c0_67 = arith.constant 0 : index
    %228 = vector.load %arg7[%227, %c0_66, %c0_67] : memref<8x8x512xf32, #tpu.memory_space<vmem>>, vector<1x8x512xf32>
    %229 = vector.shape_cast %228 : vector<1x8x512xf32> to vector<8x512xf32>
    %c0_68 = arith.constant 0 : index
    %c0_69 = arith.constant 0 : index
    %230 = vector.load %arg2[%c0_68, %c0_69] : memref<128x512xf32, #tpu.memory_space<vmem>>, vector<128x512xf32>
    %cst_70 = arith.constant dense<0.000000e+00> : vector<8x512xf32>
    %231 = tpu.matmul %226, %230, %cst_70 {dimension_numbers = #tpu.dot_dimension_numbers<[1], [0], [0], [1], [0, 0, 1, 1], [], []>} : vector<8x128xf32>, vector<128x512xf32>, vector<8x512xf32> -> vector<8x512xf32>
    %232 = arith.addf %229, %231 : vector<8x512xf32>
    %233 = vector.extract_strided_slice %232 {offsets = [0, 0], sizes = [8, 128], strides = [1, 1]} : vector<8x512xf32> to vector<8x128xf32>
    %234 = arith.negf %233 : vector<8x128xf32>
    %235 = math.exp %234 : vector<8x128xf32>
    %cst_71 = arith.constant 1.000000e+00 : f32
    %236 = vector.broadcast %cst_71 : f32 to vector<8x128xf32>
    %237 = arith.addf %236, %235 : vector<8x128xf32>
    %238 = arith.divf %236, %237 : vector<8x128xf32>
    %239 = vector.extract_strided_slice %232 {offsets = [0, 128], sizes = [8, 128], strides = [1, 1]} : vector<8x512xf32> to vector<8x128xf32>
    %240 = arith.negf %239 : vector<8x128xf32>
    %241 = math.exp %240 : vector<8x128xf32>
    %cst_72 = arith.constant 1.000000e+00 : f32
    %242 = vector.broadcast %cst_72 : f32 to vector<8x128xf32>
    %243 = arith.addf %242, %241 : vector<8x128xf32>
    %244 = arith.divf %242, %243 : vector<8x128xf32>
    %245 = vector.extract_strided_slice %232 {offsets = [0, 256], sizes = [8, 128], strides = [1, 1]} : vector<8x512xf32> to vector<8x128xf32>
    %246 = math.tanh %245 : vector<8x128xf32>
    %247 = vector.extract_strided_slice %232 {offsets = [0, 384], sizes = [8, 128], strides = [1, 1]} : vector<8x512xf32> to vector<8x128xf32>
    %248 = arith.negf %247 : vector<8x128xf32>
    %249 = math.exp %248 : vector<8x128xf32>
    %cst_73 = arith.constant 1.000000e+00 : f32
    %250 = vector.broadcast %cst_73 : f32 to vector<8x128xf32>
    %251 = arith.addf %250, %249 : vector<8x128xf32>
    %252 = arith.divf %250, %251 : vector<8x128xf32>
    %253 = arith.mulf %244, %224 : vector<8x128xf32>
    %254 = arith.mulf %238, %246 : vector<8x128xf32>
    %255 = arith.addf %253, %254 : vector<8x128xf32>
    %256 = math.tanh %255 : vector<8x128xf32>
    %257 = arith.mulf %252, %256 : vector<8x128xf32>
    %c8_i32 = arith.constant 8 : i32
    %c0_74 = arith.constant 0 : index
    %c0_75 = arith.constant 0 : index
    %258 = vector.load %arg4[%c0_74, %c0_75] : memref<1x128xf32, #tpu.memory_space<vmem>>, vector<1x128xf32>
    %259 = vector.broadcast %258 : vector<1x128xf32> to vector<8x128xf32>
    %260 = arith.mulf %257, %259 : vector<8x128xf32>
    %cst_76 = arith.constant dense<0.000000e+00> : vector<8xf32>
    %261 = vector.multi_reduction <add>, %260, %cst_76 [1] : vector<8x128xf32> to vector<8xf32>
    %262 = vector.shape_cast %261 : vector<8xf32> to vector<8x1xf32>
    %c0_77 = arith.constant 0 : index
    %c0_78 = arith.constant 0 : index
    %263 = memref.load %arg5[%c0_77, %c0_78] : memref<1x1xf32, #tpu.memory_space<smem>>
    %264 = vector.broadcast %263 : f32 to vector<8x1xf32>
    %265 = arith.addf %262, %264 : vector<8x1xf32>
    %c0_79 = arith.constant 0 : index
    %c0_80 = arith.constant 0 : index
    %266 = vector.load %arg6[%c0_79, %c0_80] : memref<8x1xf32, #tpu.memory_space<vmem>>, vector<8x1xf32>
    tpu.vector_store %arg6[%c0_79, %c0_80], %265 {strides = array<i32>} : memref<8x1xf32, #tpu.memory_space<vmem>>, vector<8x1xf32>,
    return
  }
}

</mosaic_0001>

<llo_original>
// kernel: tpu_custom_call.1
$region0: #{tpu_custom_call.1}
  #allocation0 [shape = 'u32[]', space=smem, size = 0x4, offset = 0x4, fixed_abs, tag = 'smem constant byte address 0x4 - core index']
  #allocation1 [shape = 'u32[144,128]{1,0:T(1,128)}', space=vmem, size = 0x12000, scoped, tag = 'internal scratch']
  #allocation2 [shape = 'f32[8,8,512]{2,1,0:T(8,128)}', space=vmem, size = 0x20000, scoped, tag = 'scratch operand']
  #allocation3 [shape = 'f32[1,1]{1,0:T(1,128)S(6)}', space=smem, size = 0x200, scoped, tag = 'scoped memory for tpu_custom_call.1']
  %s0 = inlined_call_operand.vmem [shape: f32[64,8], index: 0, kind: input, shape index: {}]
  %s1 = inlined_call_operand.vmem [shape: f32[8,512], index: 1, kind: input, shape index: {}]
  %s2 = inlined_call_operand.hbm [shape: f32[128,512], index: 2, kind: input, shape index: {}]
  %s3 = inlined_call_operand.vmem [shape: f32[1,512], index: 3, kind: input, shape index: {}]
  %s4 = inlined_call_operand.vmem [shape: f32[1,128], index: 4, kind: input, shape index: {}]
  %s5 = inlined_call_operand.<no memory space> [shape: f32[1,1], index: 5, kind: input, shape index: {}]
  %s6 = inlined_call_operand.vmem [shape: f32[8,1], index: 6, kind: output, shape index: {}]
  %s7 = sld [smem:[#allocation0]]
  $region38: #{tpu_custom_call.1} parent=0
    _
  %s9 = ssub.s32 1, %s7
  %s10 = scalar_select 0, %s9, %s7
  %11 = sst [smem:[#allocation3]] %s5
  $region1: #{tpu_custom_call.1} parent=0
    #allocation4 [shape = 'u8[262144]{0}', space=vmem, size = 0x40000, scoped, tag = 'input window, operand 2, single buffered']
    #allocation5 [shape = 's32[1]{0}', space=sflag, size = 0x4, scoped, tag = 'scoped memory for tpu_custom_call.1']
    %12 = vsyncpa [#allocation5], 0
    // Predicated region
    $region2: #{tpu_custom_call.1} parent=1 // pred_check
      _
    $region3: #{tpu_custom_call.1} parent=1 // pred_check_branch
      %14 = sbr.rel (0) target = $region5
    $region4: #{tpu_custom_call.1} parent=1 // pred_region
      _
    $region5: #{tpu_custom_call.1} parent=1 // pred_fallthru
      _
    // Predicated region
    $region6: #{tpu_custom_call.1} parent=1 // pred_check
      _
    $region7: #{tpu_custom_call.1} parent=1 // pred_check_branch
      %16 = sbr.rel (0) target = $region9
    $region8: #{tpu_custom_call.1} parent=1 // pred_region
      _
    $region9: #{tpu_custom_call.1} parent=1 // pred_fallthru
      _
    // Predicated region
    $region10: #{tpu_custom_call.1} parent=1 // pred_check
      _
    $region11: #{tpu_custom_call.1} parent=1 // pred_check_branch
      %18 = sbr.rel (0) target = $region13
    $region12: #{tpu_custom_call.1} parent=1 // pred_region
      %s20 = ssub.s32 8192, 8192
      %21 = vsyncadd [#allocation5], %s20
      %s22 = sshll.u32 [#allocation4], 4
      %s23 = int_to_ptr.vmem [resolvable:$true] %s22
      %28 = dma.hbm_to_vmem [thread:$0]  %s2, 8192, %s23, [#allocation5], 512, 512, 32
    $region13: #{tpu_custom_call.1} parent=1 // pred_fallthru
      _
    // Predicated region
    $region14: #{tpu_custom_call.1} parent=1 // pred_check
      _
    $region15: #{tpu_custom_call.1} parent=1 // pred_check_branch
      %30 = sbr.rel (0) target = $region17
    $region16: #{tpu_custom_call.1} parent=1 // pred_region
      _
    $region17: #{tpu_custom_call.1} parent=1 // pred_fallthru
      _
    // Predicated region
    $region18: #{tpu_custom_call.1} parent=1 // pred_check
      _
    $region19: #{tpu_custom_call.1} parent=1 // pred_check_branch
      %32 = sbr.rel (0) target = $region21
    $region20: #{tpu_custom_call.1} parent=1 // pred_region
      _
    $region21: #{tpu_custom_call.1} parent=1 // pred_fallthru
      _
    // Predicated region
    $region22: #{tpu_custom_call.1} parent=1 // pred_check
      _
    $region23: #{tpu_custom_call.1} parent=1 // pred_check_branch
      %34 = sbr.rel (0) target = $region25
    $region24: #{tpu_custom_call.1} parent=1 // pred_region
      _
    $region25: #{tpu_custom_call.1} parent=1 // pred_fallthru
      _
    // Predicated region
    $region26: #{tpu_custom_call.1} parent=1 // pred_check
      _
    $region27: #{tpu_custom_call.1} parent=1 // pred_check_branch
      %36 = sbr.rel (0) target = $region29
    $region28: #{tpu_custom_call.1} parent=1 // pred_region
      %37 = dma.done [#allocation5], 8192
    $region29: #{tpu_custom_call.1} parent=1 // pred_fallthru
      _
    %v38 = vld [vmem:[%s0] sm:$0xff]
    %v39 = vld [vmem:[%s0 + $0x8] sm:$0xff]
    %v40 = vld [vmem:[%s0 + $0x10] sm:$0xff]
    %v41 = vld [vmem:[%s0 + $0x18] sm:$0xff]
    %v42 = vld [vmem:[%s0 + $0x20] sm:$0xff]
    %v43 = vld [vmem:[%s0 + $0x28] sm:$0xff]
    %v44 = vld [vmem:[%s0 + $0x30] sm:$0xff]
    %v45 = vld [vmem:[%s0 + $0x38] sm:$0xff]
    %v46 = vld [vmem:[%s1] sm:$0xff]
    %v47 = vld [vmem:[%s1 + $0x8] sm:$0xff]
    %v48 = vld [vmem:[%s1 + $0x10] sm:$0xff]
    %v49 = vld [vmem:[%s1 + $0x18] sm:$0xff]
    %v50 = vld [vmem:[%s3] sm:$0xf]
    %v52 = vlaneseq
    %v53 = vshrl.u32 %v52, 7
    %v54 = vsub.s32 0, %v53
    %v55 = vrot.slane %v50, %v54
    %v56 = vlaneseq
    %v57 = vshrl.u32 %v56, 7
    %v58 = vsub.s32 1, %v57
    %v59 = vrot.slane %v50, %v58
    %v60 = vlaneseq
    %v61 = vshrl.u32 %v60, 7
    %v62 = vsub.s32 2, %v61
    %v63 = vrot.slane %v50, %v62
    %v64 = vlaneseq
    %v65 = vshrl.u32 %v64, 7
    %v66 = vsub.s32 3, %v65
    %v67 = vrot.slane %v50, %v66
    %vm72 = vcmask 64512
    %v74 = vsel %vm72, %v38, 0
    %v77 = vsel %vm72, %v39, 0
    %v80 = vsel %vm72, %v40, 0
    %v83 = vsel %vm72, %v41, 0
    %v86 = vsel %vm72, %v42, 0
    %v89 = vsel %vm72, %v43, 0
    %v92 = vsel %vm72, %v44, 0
    %v95 = vsel %vm72, %v45, 0
    %97 = vmatprep.subr.mxu0 %v47
    %98 = vmatpush1.msra.mxu0 %v46
    %99 = vmatprep.subr.mxu0 0.0
    %100 = vmatpush1.msra.mxu0 0.0
    %101 = vmatprep.subr.mxu0 0.0
    %102 = vmatpush1.msra.mxu0 0.0
    %103 = vmatprep.subr.mxu0 0.0
    %104 = vmatpush1.msra.mxu0 0.0
    %105 = vmatprep.subr.mxu0 0.0
    %106 = vmatpush1.msra.mxu0 0.0
    %107 = vmatprep.subr.mxu0 0.0
    %108 = vmatpush1.msra.mxu0 0.0
    %109 = vmatprep.subr.mxu0 0.0
    %110 = vmatpush1.msra.mxu0 0.0
    %111 = vmatprep.subr.mxu0 0.0
    %112 = vmatpush1.msra.mxu0 0.0
    %113 = vmatprep.subr.mxu0 0.0
    %114 = vmatpush1.msra.mxu0 0.0
    %115 = vmatprep.subr.mxu0 0.0
    %116 = vmatpush1.msra.mxu0 0.0
    %117 = vmatprep.subr.mxu0 0.0
    %118 = vmatpush1.msra.mxu0 0.0
    %119 = vmatprep.subr.mxu0 0.0
    %120 = vmatpush1.msra.mxu0 0.0
    %121 = vmatprep.subr.mxu0 0.0
    %122 = vmatpush1.msra.mxu0 0.0
    %123 = vmatprep.subr.mxu0 0.0
    %124 = vmatpush1.msra.mxu0 0.0
    %125 = vmatprep.subr.mxu0 0.0
    %126 = vmatpush1.msra.mxu0 0.0
    %127 = vmatprep.subr.mxu0 0.0
    %128 = vmatpush1.msra.mxu0 0.0
    %129 = vmatprep.subr.mxu0 0.0
    %130 = vmatpush1.msra.mxu0 0.0
    %131 = vmatprep.subr.mxu0 0.0
    %132 = vmatpush1.msra.mxu0 0.0
    %133 = vmatprep.subr.mxu0 0.0
    %134 = vmatpush1.msra.mxu0 0.0
    %135 = vmatprep.subr.mxu0 0.0
    %136 = vmatpush1.msra.mxu0 0.0
    %137 = vmatprep.subr.mxu0 0.0
    %138 = vmatpush1.msra.mxu0 0.0
    %139 = vmatprep.subr.mxu0 0.0
    %140 = vmatpush1.msra.mxu0 0.0
    %141 = vmatprep.subr.mxu0 0.0
    %142 = vmatpush1.msra.mxu0 0.0
    %143 = vmatprep.subr.mxu0 0.0
    %144 = vmatpush1.msra.mxu0 0.0
    %145 = vmatprep.subr.mxu0 0.0
    %146 = vmatpush1.msra.mxu0 0.0
    %147 = vmatprep.subr.mxu0 0.0
    %148 = vmatpush1.msra.mxu0 0.0
    %149 = vmatprep.subr.mxu0 0.0
    %150 = vmatpush1.msra.mxu0 0.0
    %151 = vmatprep.subr.mxu0 0.0
    %152 = vmatpush1.msra.mxu0 0.0
    %153 = vmatprep.subr.mxu0 0.0
    %154 = vmatpush1.msra.mxu0 0.0
    %155 = vmatprep.subr.mxu0 0.0
    %156 = vmatpush1.msra.mxu0 0.0
    %157 = vmatprep.subr.mxu0 0.0
    %158 = vmatpush1.msra.mxu0 0.0
    %159 = vmatprep.subr.mxu0 0.0
    %160 = vmatpush1.msra.mxu0 0.0
    %161 = vmatprep.mubr.f32.mxu0 0.0
    %162 = vmatmul.mubr.f32.gmra.mrb[0].mxu0 %v74
    %v163 = vpop.f32.mrb[0].mxu0
    %v164 = vadd.f32 %v55, %v163
    %v165 = vpop.f32.mrb[0].mxu0
    %v166 = vadd.f32 %v59, %v165
    %167 = vmatprep.mubr.f32.mxu0 0.0
    %168 = vmatmul.mubr.f32.gmra.mrb[0].mxu0 %v77
    %v169 = vpop.f32.mrb[0].mxu0
    %v170 = vadd.f32 %v55, %v169
    %v171 = vpop.f32.mrb[0].mxu0
    %v172 = vadd.f32 %v59, %v171
    %173 = vmatprep.mubr.f32.mxu0 0.0
    %174 = vmatmul.mubr.f32.gmra.mrb[0].mxu0 %v80
    %v175 = vpop.f32.mrb[0].mxu0
    %v176 = vadd.f32 %v55, %v175
    %v177 = vpop.f32.mrb[0].mxu0
    %v178 = vadd.f32 %v59, %v177
    %179 = vmatprep.mubr.f32.mxu0 0.0
    %180 = vmatmul.mubr.f32.gmra.mrb[0].mxu0 %v83
    %v181 = vpop.f32.mrb[0].mxu0
    %v182 = vadd.f32 %v55, %v181
    %v183 = vpop.f32.mrb[0].mxu0
    %v184 = vadd.f32 %v59, %v183
    %185 = vmatprep.mubr.f32.mxu0 0.0
    %186 = vmatmul.mubr.f32.gmra.mrb[0].mxu0 %v86
    %v187 = vpop.f32.mrb[0].mxu0
    %v188 = vadd.f32 %v55, %v187
    %v189 = vpop.f32.mrb[0].mxu0
    %v190 = vadd.f32 %v59, %v189
    %191 = vmatprep.mubr.f32.mxu0 0.0
    %192 = vmatmul.mubr.f32.gmra.mrb[0].mxu0 %v89
    %v193 = vpop.f32.mrb[0].mxu0
    %v194 = vadd.f32 %v55, %v193
    %v195 = vpop.f32.mrb[0].mxu0
    %v196 = vadd.f32 %v59, %v195
    %197 = vmatprep.mubr.f32.mxu0 0.0
    %198 = vmatmul.mubr.f32.gmra.mrb[0].mxu0 %v92
    %v199 = vpop.f32.mrb[0].mxu0
    %v200 = vadd.f32 %v55, %v199
    %v201 = vpop.f32.mrb[0].mxu0
    %v202 = vadd.f32 %v59, %v201
    %203 = vmatprep.mubr.f32.mxu0 0.0
    %204 = vmatmul.mubr.f32.gmra.mrb[0].mxu0 %v95
    %v205 = vpop.f32.mrb[0].mxu0
    %v206 = vadd.f32 %v55, %v205
    %v207 = vpop.f32.mrb[0].mxu0
    %v208 = vadd.f32 %v59, %v207
    %209 = vdwg.mxu0
    %210 = vmatprep.subr.mxu0 %v49
    %211 = vmatpush1.msra.mxu0 %v48
    %212 = vmatprep.subr.mxu0 0.0
    %213 = vmatpush1.msra.mxu0 0.0
    %214 = vmatprep.subr.mxu0 0.0
    %215 = vmatpush1.msra.mxu0 0.0
    %216 = vmatprep.subr.mxu0 0.0
    %217 = vmatpush1.msra.mxu0 0.0
    %218 = vmatprep.subr.mxu0 0.0
    %219 = vmatpush1.msra.mxu0 0.0
    %220 = vmatprep.subr.mxu0 0.0
    %221 = vmatpush1.msra.mxu0 0.0
    %222 = vmatprep.subr.mxu0 0.0
    %223 = vmatpush1.msra.mxu0 0.0
    %224 = vmatprep.subr.mxu0 0.0
    %225 = vmatpush1.msra.mxu0 0.0
    %226 = vmatprep.subr.mxu0 0.0
    %227 = vmatpush1.msra.mxu0 0.0
    %228 = vmatprep.subr.mxu0 0.0
    %229 = vmatpush1.msra.mxu0 0.0
    %230 = vmatprep.subr.mxu0 0.0
    %231 = vmatpush1.msra.mxu0 0.0
    %232 = vmatprep.subr.mxu0 0.0
    %233 = vmatpush1.msra.mxu0 0.0
    %234 = vmatprep.subr.mxu0 0.0
    %235 = vmatpush1.msra.mxu0 0.0
    %236 = vmatprep.subr.mxu0 0.0
    %237 = vmatpush1.msra.mxu0 0.0
    %238 = vmatprep.subr.mxu0 0.0
    %239 = vmatpush1.msra.mxu0 0.0
    %240 = vmatprep.subr.mxu0 0.0
    %241 = vmatpush1.msra.mxu0 0.0
    %242 = vmatprep.subr.mxu0 0.0
    %243 = vmatpush1.msra.mxu0 0.0
    %244 = vmatprep.subr.mxu0 0.0
    %245 = vmatpush1.msra.mxu0 0.0
    %246 = vmatprep.subr.mxu0 0.0
    %247 = vmatpush1.msra.mxu0 0.0
    %248 = vmatprep.subr.mxu0 0.0
    %249 = vmatpush1.msra.mxu0 0.0
    %250 = vmatprep.subr.mxu0 0.0
    %251 = vmatpush1.msra.mxu0 0.0
    %252 = vmatprep.subr.mxu0 0.0
    %253 = vmatpush1.msra.mxu0 0.0
    %254 = vmatprep.subr.mxu0 0.0
    %255 = vmatpush1.msra.mxu0 0.0
    %256 = vmatprep.subr.mxu0 0.0
    %257 = vmatpush1.msra.mxu0 0.0
    %258 = vmatprep.subr.mxu0 0.0
    %259 = vmatpush1.msra.mxu0 0.0
    %260 = vmatprep.subr.mxu0 0.0
    %261 = vmatpush1.msra.mxu0 0.0
    %262 = vmatprep.subr.mxu0 0.0
    %263 = vmatpush1.msra.mxu0 0.0
    %264 = vmatprep.subr.mxu0 0.0
    %265 = vmatpush1.msra.mxu0 0.0
    %266 = vmatprep.subr.mxu0 0.0
    %267 = vmatpush1.msra.mxu0 0.0
    %268 = vmatprep.subr.mxu0 0.0
    %269 = vmatpush1.msra.mxu0 0.0
    %270 = vmatprep.subr.mxu0 0.0
    %271 = vmatpush1.msra.mxu0 0.0
    %272 = vmatprep.subr.mxu0 0.0
    %273 = vmatpush1.msra.mxu0 0.0
    %274 = vmatprep.mubr.f32.mxu0 0.0
    %275 = vmatmul.mubr.f32.gmra.mrb[0].mxu0 %v74
    %v276 = vpop.f32.mrb[0].mxu0
    %v277 = vadd.f32 %v63, %v276
    %v278 = vpop.f32.mrb[0].mxu0
    %v279 = vadd.f32 %v67, %v278
    %280 = vmatprep.mubr.f32.mxu0 0.0
    %281 = vmatmul.mubr.f32.gmra.mrb[0].mxu0 %v77
    %v282 = vpop.f32.mrb[0].mxu0
    %v283 = vadd.f32 %v63, %v282
    %v284 = vpop.f32.mrb[0].mxu0
    %v285 = vadd.f32 %v67, %v284
    %286 = vmatprep.mubr.f32.mxu0 0.0
    %287 = vmatmul.mubr.f32.gmra.mrb[0].mxu0 %v80
    %v288 = vpop.f32.mrb[0].mxu0
    %v289 = vadd.f32 %v63, %v288
    %v290 = vpop.f32.mrb[0].mxu0
    %v291 = vadd.f32 %v67, %v290
    %292 = vmatprep.mubr.f32.mxu0 0.0
    %293 = vmatmul.mubr.f32.gmra.mrb[0].mxu0 %v83
    %v294 = vpop.f32.mrb[0].mxu0
    %v295 = vadd.f32 %v63, %v294
    %v296 = vpop.f32.mrb[0].mxu0
    %v297 = vadd.f32 %v67, %v296
    %298 = vmatprep.mubr.f32.mxu0 0.0
    %299 = vmatmul.mubr.f32.gmra.mrb[0].mxu0 %v86
    %v300 = vpop.f32.mrb[0].mxu0
    %v301 = vadd.f32 %v63, %v300
    %v302 = vpop.f32.mrb[0].mxu0
    %v303 = vadd.f32 %v67, %v302
    %304 = vmatprep.mubr.f32.mxu0 0.0
    %305 = vmatmul.mubr.f32.gmra.mrb[0].mxu0 %v89
    %v306 = vpop.f32.mrb[0].mxu0
    %v307 = vadd.f32 %v63, %v306
    %v308 = vpop.f32.mrb[0].mxu0
    %v309 = vadd.f32 %v67, %v308
    %310 = vmatprep.mubr.f32.mxu0 0.0
    %311 = vmatmul.mubr.f32.gmra.mrb[0].mxu0 %v92
    %v312 = vpop.f32.mrb[0].mxu0
    %v313 = vadd.f32 %v63, %v312
    %v314 = vpop.f32.mrb[0].mxu0
    %v315 = vadd.f32 %v67, %v314
    %316 = vmatprep.mubr.f32.mxu0 0.0
    %317 = vmatmul.mubr.f32.gmra.mrb[0].mxu0 %v95
    %v318 = vpop.f32.mrb[0].mxu0
    %v319 = vadd.f32 %v63, %v318
    %v320 = vpop.f32.mrb[0].mxu0
    %v321 = vadd.f32 %v67, %v320
    %322 = vdwg.mxu0
    %323 = vst [vmem:[#allocation2] sm:$0xff] %v164
    %324 = vst [vmem:[#allocation2 + $0x8] sm:$0xff] %v166
    %325 = vst [vmem:[#allocation2 + $0x10] sm:$0xff] %v277
    %326 = vst [vmem:[#allocation2 + $0x18] sm:$0xff] %v279
    %327 = vst [vmem:[#allocation2 + $0x20] sm:$0xff] %v170
    %328 = vst [vmem:[#allocation2 + $0x28] sm:$0xff] %v172
    %329 = vst [vmem:[#allocation2 + $0x30] sm:$0xff] %v283
    %330 = vst [vmem:[#allocation2 + $0x38] sm:$0xff] %v285
    %331 = vst [vmem:[#allocation2 + $0x40] sm:$0xff] %v176
    %332 = vst [vmem:[#allocation2 + $0x48] sm:$0xff] %v178
    %333 = vst [vmem:[#allocation2 + $0x50] sm:$0xff] %v289
    %334 = vst [vmem:[#allocation2 + $0x58] sm:$0xff] %v291
    %335 = vst [vmem:[#allocation2 + $0x60] sm:$0xff] %v182
    %336 = vst [vmem:[#allocation2 + $0x68] sm:$0xff] %v184
    %337 = vst [vmem:[#allocation2 + $0x70] sm:$0xff] %v295
    %338 = vst [vmem:[#allocation2 + $0x78] sm:$0xff] %v297
    %339 = vst [vmem:[#allocation2 + $0x80] sm:$0xff] %v188
    %340 = vst [vmem:[#allocation2 + $0x88] sm:$0xff] %v190
    %341 = vst [vmem:[#allocation2 + $0x90] sm:$0xff] %v301
    %342 = vst [vmem:[#allocation2 + $0x98] sm:$0xff] %v303
    %343 = vst [vmem:[#allocation2 + $0xa0] sm:$0xff] %v194
    %344 = vst [vmem:[#allocation2 + $0xa8] sm:$0xff] %v196
    %345 = vst [vmem:[#allocation2 + $0xb0] sm:$0xff] %v307
    %346 = vst [vmem:[#allocation2 + $0xb8] sm:$0xff] %v309
    %347 = vst [vmem:[#allocation2 + $0xc0] sm:$0xff] %v200
    %348 = vst [vmem:[#allocation2 + $0xc8] sm:$0xff] %v202
    %349 = vst [vmem:[#allocation2 + $0xd0] sm:$0xff] %v313
    %350 = vst [vmem:[#allocation2 + $0xd8] sm:$0xff] %v315
    %351 = vst [vmem:[#allocation2 + $0xe0] sm:$0xff] %v206
    %352 = vst [vmem:[#allocation2 + $0xe8] sm:$0xff] %v208
    %353 = vst [vmem:[#allocation2 + $0xf0] sm:$0xff] %v319
    %354 = vst [vmem:[#allocation2 + $0xf8] sm:$0xff] %v321
    %v355 = vld [vmem:[#allocation2] sm:$0xff]
    %v356 = vld [vmem:[#allocation2 + $0x8] sm:$0xff]
    %v357 = vld [vmem:[#allocation2 + $0x10] sm:$0xff]
    %v358 = vld [vmem:[#allocation2 + $0x18] sm:$0xff]
    %v359 = vld [vmem:[#allocation4] sm:$0xff]
    %v360 = vld [vmem:[#allocation4 + $0x8] sm:$0xff]
    %v361 = vld [vmem:[#allocation4 + $0x10] sm:$0xff]
    %v362 = vld [vmem:[#allocation4 + $0x18] sm:$0xff]
    %v363 = vld [vmem:[#allocation4 + $0x20] sm:$0xff]
    %v364 = vld [vmem:[#allocation4 + $0x28] sm:$0xff]
    %v365 = vld [vmem:[#allocation4 + $0x30] sm:$0xff]
    %v366 = vld [vmem:[#allocation4 + $0x38] sm:$0xff]
    %v367 = vld [vmem:[#allocation4 + $0x40] sm:$0xff]
    %v368 = vld [vmem:[#allocation4 + $0x48] sm:$0xff]
    %v369 = vld [vmem:[#allocation4 + $0x50] sm:$0xff]
    %v370 = vld [vmem:[#allocation4 + $0x58] sm:$0xff]
    %v371 = vld [vmem:[#allocation4 + $0x60] sm:$0xff]
    %v372 = vld [vmem:[#allocation4 + $0x68] sm:$0xff]
    %v373 = vld [vmem:[#allocation4 + $0x70] sm:$0xff]
    %v374 = vld [vmem:[#allocation4 + $0x78] sm:$0xff]
    %v375 = vld [vmem:[#allocation4 + $0x80] sm:$0xff]
    %v376 = vld [vmem:[#allocation4 + $0x88] sm:$0xff]
    %v377 = vld [vmem:[#allocation4 + $0x90] sm:$0xff]
    %v378 = vld [vmem:[#allocation4 + $0x98] sm:$0xff]
    %v379 = vld [vmem:[#allocation4 + $0xa0] sm:$0xff]
    %v380 = vld [vmem:[#allocation4 + $0xa8] sm:$0xff]
    %v381 = vld [vmem:[#allocation4 + $0xb0] sm:$0xff]
    %v382 = vld [vmem:[#allocation4 + $0xb8] sm:$0xff]
    %v383 = vld [vmem:[#allocation4 + $0xc0] sm:$0xff]
    %v384 = vld [vmem:[#allocation4 + $0xc8] sm:$0xff]
    %v385 = vld [vmem:[#allocation4 + $0xd0] sm:$0xff]
    %v386 = vld [vmem:[#allocation4 + $0xd8] sm:$0xff]
    %v387 = vld [vmem:[#allocation4 + $0xe0] sm:$0xff]
    %v388 = vld [vmem:[#allocation4 + $0xe8] sm:$0xff]
    %v389 = vld [vmem:[#allocation4 + $0xf0] sm:$0xff]
    %v390 = vld [vmem:[#allocation4 + $0xf8] sm:$0xff]
    %v391 = vld [vmem:[#allocation4 + $0x100] sm:$0xff]
    %v392 = vld [vmem:[#allocation4 + $0x108] sm:$0xff]
    %v393 = vld [vmem:[#allocation4 + $0x110] sm:$0xff]
    %v394 = vld [vmem:[#allocation4 + $0x118] sm:$0xff]
    %v395 = vld [vmem:[#allocation4 + $0x120] sm:$0xff]
    %v396 = vld [vmem:[#allocation4 + $0x128] sm:$0xff]
    %v397 = vld [vmem:[#allocation4 + $0x130] sm:$0xff]
    %v398 = vld [vmem:[#allocation4 + $0x138] sm:$0xff]
    %v399 = vld [vmem:[#allocation4 + $0x140] sm:$0xff]
    %v400 = vld [vmem:[#allocation4 + $0x148] sm:$0xff]
    %v401 = vld [vmem:[#allocation4 + $0x150] sm:$0xff]
    %v402 = vld [vmem:[#allocation4 + $0x158] sm:$0xff]
    %v403 = vld [vmem:[#allocation4 + $0x160] sm:$0xff]
    %v404 = vld [vmem:[#allocation4 + $0x168] sm:$0xff]
    %v405 = vld [vmem:[#allocation4 + $0x170] sm:$0xff]
    %v406 = vld [vmem:[#allocation4 + $0x178] sm:$0xff]
    %v407 = vld [vmem:[#allocation4 + $0x180] sm:$0xff]
    %v408 = vld [vmem:[#allocation4 + $0x188] sm:$0xff]
    %v409 = vld [vmem:[#allocation4 + $0x190] sm:$0xff]
    %v410 = vld [vmem:[#allocation4 + $0x198] sm:$0xff]
    %v411 = vld [vmem:[#allocation4 + $0x1a0] sm:$0xff]
    %v412 = vld [vmem:[#allocation4 + $0x1a8] sm:$0xff]
    %v413 = vld [vmem:[#allocation4 + $0x1b0] sm:$0xff]
    %v414 = vld [vmem:[#allocation4 + $0x1b8] sm:$0xff]
    %v415 = vld [vmem:[#allocation4 + $0x1c0] sm:$0xff]
    %v416 = vld [vmem:[#allocation4 + $0x1c8] sm:$0xff]
    %v417 = vld [vmem:[#allocation4 + $0x1d0] sm:$0xff]
    %v418 = vld [vmem:[#allocation4 + $0x1d8] sm:$0xff]
    %v419 = vld [vmem:[#allocation4 + $0x1e0] sm:$0xff]
    %v420 = vld [vmem:[#allocation4 + $0x1e8] sm:$0xff]
    %v421 = vld [vmem:[#allocation4 + $0x1f0] sm:$0xff]
    %v422 = vld [vmem:[#allocation4 + $0x1f8] sm:$0xff]
    %423 = vmatprep.subr.mxu0 %v360
    %424 = vmatpush1.msra.mxu0 %v359
    %425 = vmatprep.subr.mxu0 %v364
    %426 = vmatpush1.msra.mxu0 %v363
    %427 = vmatprep.subr.mxu0 %v368
    %428 = vmatpush1.msra.mxu0 %v367
    %429 = vmatprep.subr.mxu0 %v372
    %430 = vmatpush1.msra.mxu0 %v371
    %431 = vmatprep.subr.mxu0 %v376
    %432 = vmatpush1.msra.mxu0 %v375
    %433 = vmatprep.subr.mxu0 %v380
    %434 = vmatpush1.msra.mxu0 %v379
    %435 = vmatprep.subr.mxu0 %v384
    %436 = vmatpush1.msra.mxu0 %v383
    %437 = vmatprep.subr.mxu0 %v388
    %438 = vmatpush1.msra.mxu0 %v387
    %439 = vmatprep.subr.mxu0 %v392
    %440 = vmatpush1.msra.mxu0 %v391
    %441 = vmatprep.subr.mxu0 %v396
    %442 = vmatpush1.msra.mxu0 %v395
    %443 = vmatprep.subr.mxu0 %v400
    %444 = vmatpush1.msra.mxu0 %v399
    %445 = vmatprep.subr.mxu0 %v404
    %446 = vmatpush1.msra.mxu0 %v403
    %447 = vmatprep.subr.mxu0 %v408
    %448 = vmatpush1.msra.mxu0 %v407
    %449 = vmatprep.subr.mxu0 %v412
    %450 = vmatpush1.msra.mxu0 %v411
    %451 = vmatprep.subr.mxu0 %v416
    %452 = vmatpush1.msra.mxu0 %v415
    %453 = vmatprep.subr.mxu0 %v420
    %454 = vmatpush1.msra.mxu0 %v419
    %455 = vmatprep.subr.mxu0 0.0
    %456 = vmatpush1.msra.mxu0 0.0
    %457 = vmatprep.subr.mxu0 0.0
    %458 = vmatpush1.msra.mxu0 0.0
    %459 = vmatprep.subr.mxu0 0.0
    %460 = vmatpush1.msra.mxu0 0.0
    %461 = vmatprep.subr.mxu0 0.0
    %462 = vmatpush1.msra.mxu0 0.0
    %463 = vmatprep.subr.mxu0 0.0
    %464 = vmatpush1.msra.mxu0 0.0
    %465 = vmatprep.subr.mxu0 0.0
    %466 = vmatpush1.msra.mxu0 0.0
    %467 = vmatprep.subr.mxu0 0.0
    %468 = vmatpush1.msra.mxu0 0.0
    %469 = vmatprep.subr.mxu0 0.0
    %470 = vmatpush1.msra.mxu0 0.0
    %471 = vmatprep.subr.mxu0 0.0
    %472 = vmatpush1.msra.mxu0 0.0
    %473 = vmatprep.subr.mxu0 0.0
    %474 = vmatpush1.msra.mxu0 0.0
    %475 = vmatprep.subr.mxu0 0.0
    %476 = vmatpush1.msra.mxu0 0.0
    %477 = vmatprep.subr.mxu0 0.0
    %478 = vmatpush1.msra.mxu0 0.0
    %479 = vmatprep.subr.mxu0 0.0
    %480 = vmatpush1.msra.mxu0 0.0
    %481 = vmatprep.subr.mxu0 0.0
    %482 = vmatpush1.msra.mxu0 0.0
    %483 = vmatprep.subr.mxu0 0.0
    %484 = vmatpush1.msra.mxu0 0.0
    %485 = vmatprep.subr.mxu0 0.0
    %486 = vmatpush1.msra.mxu0 0.0
    %487 = vmatprep.mubr.f32.mxu0 0.0
    %488 = vmatmul.mubr.f32.gmra.mrb[0].mxu0 0.0
    %v489 = vpop.f32.mrb[0].mxu0
    %v490 = vadd.f32 0.0, %v489
    %v491 = vpop.f32.mrb[0].mxu0
    %v492 = vadd.f32 0.0, %v491
    %493 = vdwg.mxu0
    %494 = vmatprep.subr.mxu0 %v362
    %495 = vmatpush1.msra.mxu0 %v361
    %496 = vmatprep.subr.mxu0 %v366
    %497 = vmatpush1.msra.mxu0 %v365
    %498 = vmatprep.subr.mxu0 %v370
    %499 = vmatpush1.msra.mxu0 %v369
    %500 = vmatprep.subr.mxu0 %v374
    %501 = vmatpush1.msra.mxu0 %v373
    %502 = vmatprep.subr.mxu0 %v378
    %503 = vmatpush1.msra.mxu0 %v377
    %504 = vmatprep.subr.mxu0 %v382
    %505 = vmatpush1.msra.mxu0 %v381
    %506 = vmatprep.subr.mxu0 %v386
    %507 = vmatpush1.msra.mxu0 %v385
    %508 = vmatprep.subr.mxu0 %v390
    %509 = vmatpush1.msra.mxu0 %v389
    %510 = vmatprep.subr.mxu0 %v394
    %511 = vmatpush1.msra.mxu0 %v393
    %512 = vmatprep.subr.mxu0 %v398
    %513 = vmatpush1.msra.mxu0 %v397
    %514 = vmatprep.subr.mxu0 %v402
    %515 = vmatpush1.msra.mxu0 %v401
    %516 = vmatprep.subr.mxu0 %v406
    %517 = vmatpush1.msra.mxu0 %v405
    %518 = vmatprep.subr.mxu0 %v410
    %519 = vmatpush1.msra.mxu0 %v409
    %520 = vmatprep.subr.mxu0 %v414
    %521 = vmatpush1.msra.mxu0 %v413
    %522 = vmatprep.subr.mxu0 %v418
    %523 = vmatpush1.msra.mxu0 %v417
    %524 = vmatprep.subr.mxu0 %v422
    %525 = vmatpush1.msra.mxu0 %v421
    %526 = vmatprep.subr.mxu0 0.0
    %527 = vmatpush1.msra.mxu0 0.0
    %528 = vmatprep.subr.mxu0 0.0
    %529 = vmatpush1.msra.mxu0 0.0
    %530 = vmatprep.subr.mxu0 0.0
    %531 = vmatpush1.msra.mxu0 0.0
    %532 = vmatprep.subr.mxu0 0.0
    %533 = vmatpush1.msra.mxu0 0.0
    %534 = vmatprep.subr.mxu0 0.0
    %535 = vmatpush1.msra.mxu0 0.0
    %536 = vmatprep.subr.mxu0 0.0
    %537 = vmatpush1.msra.mxu0 0.0
    %538 = vmatprep.subr.mxu0 0.0
    %539 = vmatpush1.msra.mxu0 0.0
    %540 = vmatprep.subr.mxu0 0.0
    %541 = vmatpush1.msra.mxu0 0.0
    %542 = vmatprep.subr.mxu0 0.0
    %543 = vmatpush1.msra.mxu0 0.0
    %544 = vmatprep.subr.mxu0 0.0
    %545 = vmatpush1.msra.mxu0 0.0
    %546 = vmatprep.subr.mxu0 0.0
    %547 = vmatpush1.msra.mxu0 0.0
    %548 = vmatprep.subr.mxu0 0.0
    %549 = vmatpush1.msra.mxu0 0.0
    %550 = vmatprep.subr.mxu0 0.0
    %551 = vmatpush1.msra.mxu0 0.0
    %552 = vmatprep.subr.mxu0 0.0
    %553 = vmatpush1.msra.mxu0 0.0
    %554 = vmatprep.subr.mxu0 0.0
    %555 = vmatpush1.msra.mxu0 0.0
    %556 = vmatprep.subr.mxu0 0.0
    %557 = vmatpush1.msra.mxu0 0.0
    %558 = vmatprep.mubr.f32.mxu0 0.0
    %559 = vmatmul.mubr.f32.gmra.mrb[0].mxu0 0.0
    %v560 = vpop.f32.mrb[0].mxu0
    %v561 = vadd.f32 0.0, %v560
    %v562 = vpop.f32.mrb[0].mxu0
    %v563 = vadd.f32 0.0, %v562
    %564 = vdwg.mxu0
    %v565 = vadd.f32 %v355, %v490
    %v566 = vadd.f32 %v356, %v492
    %v567 = vadd.f32 %v357, %v561
    %v568 = vadd.f32 %v358, %v563
    %v569 = vxor.u32 %v565, 2147483648
    %v570 = vmul.f32 %v569, 1.442695
    %v571 = vpow.pop %v570
    %v572 = vadd.f32 %v571, 1.0
    %v573 = vrcp.pop %v572
    %v574 = vmul.f32 1.0, %v573
    %v575 = vxor.u32 %v566, 2147483648
    %v576 = vmul.f32 %v575, 1.442695
    %v577 = vpow.pop %v576
    %v578 = vadd.f32 %v577, 1.0
    %v579 = vrcp.pop %v578
    %v580 = vmul.f32 1.0, %v579
    %v581 = vtanh.pop %v567
    %v582 = vxor.u32 %v568, 2147483648
    %v583 = vmul.f32 %v582, 1.442695
    %v584 = vpow.pop %v583
    %v585 = vadd.f32 %v584, 1.0
    %v586 = vrcp.pop %v585
    %v587 = vmul.f32 1.0, %v586
    %v588 = vmul.f32 %v580, 0.0
    %v589 = vmul.f32 %v574, %v581
    %v590 = vadd.f32 %v588, %v589
    %v591 = vtanh.pop %v590
    %v592 = vmul.f32 %v587, %v591
    %s593 = scalar_lea.vmem [#allocation2], 32
    %v594 = vld [vmem:[%s593] sm:$0xff]
    %v595 = vld [vmem:[%s593 + $0x8] sm:$0xff]
    %v596 = vld [vmem:[%s593 + $0x10] sm:$0xff]
    %v597 = vld [vmem:[%s593 + $0x18] sm:$0xff]
    %598 = vmatprep.subr.mxu0 %v360
    %599 = vmatpush1.msra.mxu0 %v359
    %600 = vmatprep.subr.mxu0 %v364
    %601 = vmatpush1.msra.mxu0 %v363
    %602 = vmatprep.subr.mxu0 %v368
    %603 = vmatpush1.msra.mxu0 %v367
    %604 = vmatprep.subr.mxu0 %v372
    %605 = vmatpush1.msra.mxu0 %v371
    %606 = vmatprep.subr.mxu0 %v376
    %607 = vmatpush1.msra.mxu0 %v375
    %608 = vmatprep.subr.mxu0 %v380
    %609 = vmatpush1.msra.mxu0 %v379
    %610 = vmatprep.subr.mxu0 %v384
    %611 = vmatpush1.msra.mxu0 %v383
    %612 = vmatprep.subr.mxu0 %v388
    %613 = vmatpush1.msra.mxu0 %v387
    %614 = vmatprep.subr.mxu0 %v392
    %615 = vmatpush1.msra.mxu0 %v391
    %616 = vmatprep.subr.mxu0 %v396
    %617 = vmatpush1.msra.mxu0 %v395
    %618 = vmatprep.subr.mxu0 %v400
    %619 = vmatpush1.msra.mxu0 %v399
    %620 = vmatprep.subr.mxu0 %v404
    %621 = vmatpush1.msra.mxu0 %v403
    %622 = vmatprep.subr.mxu0 %v408
    %623 = vmatpush1.msra.mxu0 %v407
    %624 = vmatprep.subr.mxu0 %v412
    %625 = vmatpush1.msra.mxu0 %v411
    %626 = vmatprep.subr.mxu0 %v416
    %627 = vmatpush1.msra.mxu0 %v415
    %628 = vmatprep.subr.mxu0 %v420
    %629 = vmatpush1.msra.mxu0 %v419
    %630 = vmatprep.subr.mxu0 0.0
    %631 = vmatpush1.msra.mxu0 0.0
    %632 = vmatprep.subr.mxu0 0.0
    %633 = vmatpush1.msra.mxu0 0.0
    %634 = vmatprep.subr.mxu0 0.0
    %635 = vmatpush1.msra.mxu0 0.0
    %636 = vmatprep.subr.mxu0 0.0
    %637 = vmatpush1.msra.mxu0 0.0
    %638 = vmatprep.subr.mxu0 0.0
    %639 = vmatpush1.msra.mxu0 0.0
    %640 = vmatprep.subr.mxu0 0.0
    %641 = vmatpush1.msra.mxu0 0.0
    %642 = vmatprep.subr.mxu0 0.0
    %643 = vmatpush1.msra.mxu0 0.0
    %644 = vmatprep.subr.mxu0 0.0
    %645 = vmatpush1.msra.mxu0 0.0
    %646 = vmatprep.subr.mxu0 0.0
    %647 = vmatpush1.msra.mxu0 0.0
    %648 = vmatprep.subr.mxu0 0.0
    %649 = vmatpush1.msra.mxu0 0.0
    %650 = vmatprep.subr.mxu0 0.0
    %651 = vmatpush1.msra.mxu0 0.0
    %652 = vmatprep.subr.mxu0 0.0
    %653 = vmatpush1.msra.mxu0 0.0
    %654 = vmatprep.subr.mxu0 0.0
    %655 = vmatpush1.msra.mxu0 0.0
    %656 = vmatprep.subr.mxu0 0.0
    %657 = vmatpush1.msra.mxu0 0.0
    %658 = vmatprep.subr.mxu0 0.0
    %659 = vmatpush1.msra.mxu0 0.0
    %660 = vmatprep.subr.mxu0 0.0
    %661 = vmatpush1.msra.mxu0 0.0
    %662 = vmatprep.mubr.f32.mxu0 0.0
    %663 = vmatmul.mubr.f32.gmra.mrb[0].mxu0 %v592
    %v664 = vpop.f32.mrb[0].mxu0
    %v665 = vadd.f32 0.0, %v664
    %v666 = vpop.f32.mrb[0].mxu0
    %v667 = vadd.f32 0.0, %v666
    %668 = vdwg.mxu0
    %669 = vmatprep.subr.mxu0 %v362
    %670 = vmatpush1.msra.mxu0 %v361
    %671 = vmatprep.subr.mxu0 %v366
    %672 = vmatpush1.msra.mxu0 %v365
    %673 = vmatprep.subr.mxu0 %v370
    %674 = vmatpush1.msra.mxu0 %v369
    %675 = vmatprep.subr.mxu0 %v374
    %676 = vmatpush1.msra.mxu0 %v373
    %677 = vmatprep.subr.mxu0 %v378
    %678 = vmatpush1.msra.mxu0 %v377
    %679 = vmatprep.subr.mxu0 %v382
    %680 = vmatpush1.msra.mxu0 %v381
    %681 = vmatprep.subr.mxu0 %v386
    %682 = vmatpush1.msra.mxu0 %v385
    %683 = vmatprep.subr.mxu0 %v390
    %684 = vmatpush1.msra.mxu0 %v389
    %685 = vmatprep.subr.mxu0 %v394
    %686 = vmatpush1.msra.mxu0 %v393
    %687 = vmatprep.subr.mxu0 %v398
    %688 = vmatpush1.msra.mxu0 %v397
    %689 = vmatprep.subr.mxu0 %v402
    %690 = vmatpush1.msra.mxu0 %v401
    %691 = vmatprep.subr.mxu0 %v406
    %692 = vmatpush1.msra.mxu0 %v405
    %693 = vmatprep.subr.mxu0 %v410
    %694 = vmatpush1.msra.mxu0 %v409
    %695 = vmatprep.subr.mxu0 %v414
    %696 = vmatpush1.msra.mxu0 %v413
    %697 = vmatprep.subr.mxu0 %v418
    %698 = vmatpush1.msra.mxu0 %v417
    %699 = vmatprep.subr.mxu0 %v422
    %700 = vmatpush1.msra.mxu0 %v421
    %701 = vmatprep.subr.mxu0 0.0
    %702 = vmatpush1.msra.mxu0 0.0
    %703 = vmatprep.subr.mxu0 0.0
    %704 = vmatpush1.msra.mxu0 0.0
    %705 = vmatprep.subr.mxu0 0.0
    %706 = vmatpush1.msra.mxu0 0.0
    %707 = vmatprep.subr.mxu0 0.0
    %708 = vmatpush1.msra.mxu0 0.0
    %709 = vmatprep.subr.mxu0 0.0
    %710 = vmatpush1.msra.mxu0 0.0
    %711 = vmatprep.subr.mxu0 0.0
    %712 = vmatpush1.msra.mxu0 0.0
    %713 = vmatprep.subr.mxu0 0.0
    %714 = vmatpush1.msra.mxu0 0.0
    %715 = vmatprep.subr.mxu0 0.0
    %716 = vmatpush1.msra.mxu0 0.0
    %717 = vmatprep.subr.mxu0 0.0
    %718 = vmatpush1.msra.mxu0 0.0
    %719 = vmatprep.subr.mxu0 0.0
    %720 = vmatpush1.msra.mxu0 0.0
    %721 = vmatprep.subr.mxu0 0.0
    %722 = vmatpush1.msra.mxu0 0.0
    %723 = vmatprep.subr.mxu0 0.0
    %724 = vmatpush1.msra.mxu0 0.0
    %725 = vmatprep.subr.mxu0 0.0
    %726 = vmatpush1.msra.mxu0 0.0
    %727 = vmatprep.subr.mxu0 0.0
    %728 = vmatpush1.msra.mxu0 0.0
    %729 = vmatprep.subr.mxu0 0.0
    %730 = vmatpush1.msra.mxu0 0.0
    %731 = vmatprep.subr.mxu0 0.0
    %732 = vmatpush1.msra.mxu0 0.0
    %733 = vmatprep.mubr.f32.mxu0 0.0
    %734 = vmatmul.mubr.f32.gmra.mrb[0].mxu0 %v592
    %v735 = vpop.f32.mrb[0].mxu0
    %v736 = vadd.f32 0.0, %v735
    %v737 = vpop.f32.mrb[0].mxu0
    %v738 = vadd.f32 0.0, %v737
    %739 = vdwg.mxu0
    %v740 = vadd.f32 %v594, %v665
    %v741 = vadd.f32 %v595, %v667
    %v742 = vadd.f32 %v596, %v736
    %v743 = vadd.f32 %v597, %v738
    %v744 = vxor.u32 %v740, 2147483648
    %v745 = vmul.f32 %v744, 1.442695
    %v746 = vpow.pop %v745
    %v747 = vadd.f32 %v746, 1.0
    %v748 = vrcp.pop %v747
    %v749 = vmul.f32 1.0, %v748
    %v750 = vxor.u32 %v741, 2147483648
    %v751 = vmul.f32 %v750, 1.442695
    %v752 = vpow.pop %v751
    %v753 = vadd.f32 %v752, 1.0
    %v754 = vrcp.pop %v753
    %v755 = vmul.f32 1.0, %v754
    %v756 = vtanh.pop %v742
    %v757 = vxor.u32 %v743, 2147483648
    %v758 = vmul.f32 %v757, 1.442695
    %v759 = vpow.pop %v758
    %v760 = vadd.f32 %v759, 1.0
    %v761 = vrcp.pop %v760
    %v762 = vmul.f32 1.0, %v761
    %v763 = vmul.f32 %v755, %v590
    %v764 = vmul.f32 %v749, %v756
    %v765 = vadd.f32 %v763, %v764
    %v766 = vtanh.pop %v765
    %v767 = vmul.f32 %v762, %v766
    %s768 = scalar_lea.vmem [#allocation2], 64
    %v769 = vld [vmem:[%s768] sm:$0xff]
    %v770 = vld [vmem:[%s768 + $0x8] sm:$0xff]
    %v771 = vld [vmem:[%s768 + $0x10] sm:$0xff]
    %v772 = vld [vmem:[%s768 + $0x18] sm:$0xff]
    %773 = vmatprep.subr.mxu0 %v360
    %774 = vmatpush1.msra.mxu0 %v359
    %775 = vmatprep.subr.mxu0 %v364
    %776 = vmatpush1.msra.mxu0 %v363
    %777 = vmatprep.subr.mxu0 %v368
    %778 = vmatpush1.msra.mxu0 %v367
    %779 = vmatprep.subr.mxu0 %v372
    %780 = vmatpush1.msra.mxu0 %v371
    %781 = vmatprep.subr.mxu0 %v376
    %782 = vmatpush1.msra.mxu0 %v375
    %783 = vmatprep.subr.mxu0 %v380
    %784 = vmatpush1.msra.mxu0 %v379
    %785 = vmatprep.subr.mxu0 %v384
    %786 = vmatpush1.msra.mxu0 %v383
    %787 = vmatprep.subr.mxu0 %v388
    %788 = vmatpush1.msra.mxu0 %v387
    %789 = vmatprep.subr.mxu0 %v392
    %790 = vmatpush1.msra.mxu0 %v391
    %791 = vmatprep.subr.mxu0 %v396
    %792 = vmatpush1.msra.mxu0 %v395
    %793 = vmatprep.subr.mxu0 %v400
    %794 = vmatpush1.msra.mxu0 %v399
    %795 = vmatprep.subr.mxu0 %v404
    %796 = vmatpush1.msra.mxu0 %v403
    %797 = vmatprep.subr.mxu0 %v408
    %798 = vmatpush1.msra.mxu0 %v407
    %799 = vmatprep.subr.mxu0 %v412
    %800 = vmatpush1.msra.mxu0 %v411
    %801 = vmatprep.subr.mxu0 %v416
    %802 = vmatpush1.msra.mxu0 %v415
    %803 = vmatprep.subr.mxu0 %v420
    %804 = vmatpush1.msra.mxu0 %v419
    %805 = vmatprep.subr.mxu0 0.0
    %806 = vmatpush1.msra.mxu0 0.0
    %807 = vmatprep.subr.mxu0 0.0
    %808 = vmatpush1.msra.mxu0 0.0
    %809 = vmatprep.subr.mxu0 0.0
    %810 = vmatpush1.msra.mxu0 0.0
    %811 = vmatprep.subr.mxu0 0.0
    %812 = vmatpush1.msra.mxu0 0.0
    %813 = vmatprep.subr.mxu0 0.0
    %814 = vmatpush1.msra.mxu0 0.0
    %815 = vmatprep.subr.mxu0 0.0
    %816 = vmatpush1.msra.mxu0 0.0
    %817 = vmatprep.subr.mxu0 0.0
    %818 = vmatpush1.msra.mxu0 0.0
    %819 = vmatprep.subr.mxu0 0.0
    %820 = vmatpush1.msra.mxu0 0.0
    %821 = vmatprep.subr.mxu0 0.0
    %822 = vmatpush1.msra.mxu0 0.0
    %823 = vmatprep.subr.mxu0 0.0
    %824 = vmatpush1.msra.mxu0 0.0
    %825 = vmatprep.subr.mxu0 0.0
    %826 = vmatpush1.msra.mxu0 0.0
    %827 = vmatprep.subr.mxu0 0.0
    %828 = vmatpush1.msra.mxu0 0.0
    %829 = vmatprep.subr.mxu0 0.0
    %830 = vmatpush1.msra.mxu0 0.0
    %831 = vmatprep.subr.mxu0 0.0
    %832 = vmatpush1.msra.mxu0 0.0
    %833 = vmatprep.subr.mxu0 0.0
    %834 = vmatpush1.msra.mxu0 0.0
    %835 = vmatprep.subr.mxu0 0.0
    %836 = vmatpush1.msra.mxu0 0.0
    %837 = vmatprep.mubr.f32.mxu0 0.0
    %838 = vmatmul.mubr.f32.gmra.mrb[0].mxu0 %v767
    %v839 = vpop.f32.mrb[0].mxu0
    %v840 = vadd.f32 0.0, %v839
    %v841 = vpop.f32.mrb[0].mxu0
    %v842 = vadd.f32 0.0, %v841
    %843 = vdwg.mxu0
    %844 = vmatprep.subr.mxu0 %v362
    %845 = vmatpush1.msra.mxu0 %v361
    %846 = vmatprep.subr.mxu0 %v366
    %847 = vmatpush1.msra.mxu0 %v365
    %848 = vmatprep.subr.mxu0 %v370
    %849 = vmatpush1.msra.mxu0 %v369
    %850 = vmatprep.subr.mxu0 %v374
    %851 = vmatpush1.msra.mxu0 %v373
    %852 = vmatprep.subr.mxu0 %v378
    %853 = vmatpush1.msra.mxu0 %v377
    %854 = vmatprep.subr.mxu0 %v382
    %855 = vmatpush1.msra.mxu0 %v381
    %856 = vmatprep.subr.mxu0 %v386
    %857 = vmatpush1.msra.mxu0 %v385
    %858 = vmatprep.subr.mxu0 %v390
    %859 = vmatpush1.msra.mxu0 %v389
    %860 = vmatprep.subr.mxu0 %v394
    %861 = vmatpush1.msra.mxu0 %v393
    %862 = vmatprep.subr.mxu0 %v398
    %863 = vmatpush1.msra.mxu0 %v397
    %864 = vmatprep.subr.mxu0 %v402
    %865 = vmatpush1.msra.mxu0 %v401
    %866 = vmatprep.subr.mxu0 %v406
    %867 = vmatpush1.msra.mxu0 %v405
    %868 = vmatprep.subr.mxu0 %v410
    %869 = vmatpush1.msra.mxu0 %v409
    %870 = vmatprep.subr.mxu0 %v414
    %871 = vmatpush1.msra.mxu0 %v413
    %872 = vmatprep.subr.mxu0 %v418
    %873 = vmatpush1.msra.mxu0 %v417
    %874 = vmatprep.subr.mxu0 %v422
    %875 = vmatpush1.msra.mxu0 %v421
    %876 = vmatprep.subr.mxu0 0.0
    %877 = vmatpush1.msra.mxu0 0.0
    %878 = vmatprep.subr.mxu0 0.0
    %879 = vmatpush1.msra.mxu0 0.0
    %880 = vmatprep.subr.mxu0 0.0
    %881 = vmatpush1.msra.mxu0 0.0
    %882 = vmatprep.subr.mxu0 0.0
    %883 = vmatpush1.msra.mxu0 0.0
    %884 = vmatprep.subr.mxu0 0.0
    %885 = vmatpush1.msra.mxu0 0.0
    %886 = vmatprep.subr.mxu0 0.0
    %887 = vmatpush1.msra.mxu0 0.0
    %888 = vmatprep.subr.mxu0 0.0
    %889 = vmatpush1.msra.mxu0 0.0
    %890 = vmatprep.subr.mxu0 0.0
    %891 = vmatpush1.msra.mxu0 0.0
    %892 = vmatprep.subr.mxu0 0.0
    %893 = vmatpush1.msra.mxu0 0.0
    %894 = vmatprep.subr.mxu0 0.0
    %895 = vmatpush1.msra.mxu0 0.0
    %896 = vmatprep.subr.mxu0 0.0
    %897 = vmatpush1.msra.mxu0 0.0
    %898 = vmatprep.subr.mxu0 0.0
    %899 = vmatpush1.msra.mxu0 0.0
    %900 = vmatprep.subr.mxu0 0.0
    %901 = vmatpush1.msra.mxu0 0.0
    %902 = vmatprep.subr.mxu0 0.0
    %903 = vmatpush1.msra.mxu0 0.0
    %904 = vmatprep.subr.mxu0 0.0
    %905 = vmatpush1.msra.mxu0 0.0
    %906 = vmatprep.subr.mxu0 0.0
    %907 = vmatpush1.msra.mxu0 0.0
    %908 = vmatprep.mubr.f32.mxu0 0.0
    %909 = vmatmul.mubr.f32.gmra.mrb[0].mxu0 %v767
    %v910 = vpop.f32.mrb[0].mxu0
    %v911 = vadd.f32 0.0, %v910
    %v912 = vpop.f32.mrb[0].mxu0
    %v913 = vadd.f32 0.0, %v912
    %914 = vdwg.mxu0
    %v915 = vadd.f32 %v769, %v840
    %v916 = vadd.f32 %v770, %v842
    %v917 = vadd.f32 %v771, %v911
    %v918 = vadd.f32 %v772, %v913
    %v919 = vxor.u32 %v915, 2147483648
    %v920 = vmul.f32 %v919, 1.442695
    %v921 = vpow.pop %v920
    %v922 = vadd.f32 %v921, 1.0
    %v923 = vrcp.pop %v922
    %v924 = vmul.f32 1.0, %v923
    %v925 = vxor.u32 %v916, 2147483648
    %v926 = vmul.f32 %v925, 1.442695
    %v927 = vpow.pop %v926
    %v928 = vadd.f32 %v927, 1.0
    %v929 = vrcp.pop %v928
    %v930 = vmul.f32 1.0, %v929
    %v931 = vtanh.pop %v917
    %v932 = vxor.u32 %v918, 2147483648
    %v933 = vmul.f32 %v932, 1.442695
    %v934 = vpow.pop %v933
    %v935 = vadd.f32 %v934, 1.0
    %v936 = vrcp.pop %v935
    %v937 = vmul.f32 1.0, %v936
    %v938 = vmul.f32 %v930, %v765
    %v939 = vmul.f32 %v924, %v931
    %v940 = vadd.f32 %v938, %v939
    %v941 = vtanh.pop %v940
    %v942 = vmul.f32 %v937, %v941
    %s943 = scalar_lea.vmem [#allocation2], 96
    %v944 = vld [vmem:[%s943] sm:$0xff]
    %v945 = vld [vmem:[%s943 + $0x8] sm:$0xff]
    %v946 = vld [vmem:[%s943 + $0x10] sm:$0xff]
    %v947 = vld [vmem:[%s943 + $0x18] sm:$0xff]
    %948 = vmatprep.subr.mxu0 %v360
    %949 = vmatpush1.msra.mxu0 %v359
    %950 = vmatprep.subr.mxu0 %v364
    %951 = vmatpush1.msra.mxu0 %v363
    %952 = vmatprep.subr.mxu0 %v368
    %953 = vmatpush1.msra.mxu0 %v367
    %954 = vmatprep.subr.mxu0 %v372
    %955 = vmatpush1.msra.mxu0 %v371
    %956 = vmatprep.subr.mxu0 %v376
    %957 = vmatpush1.msra.mxu0 %v375
    %958 = vmatprep.subr.mxu0 %v380
    %959 = vmatpush1.msra.mxu0 %v379
    %960 = vmatprep.subr.mxu0 %v384
    %961 = vmatpush1.msra.mxu0 %v383
    %962 = vmatprep.subr.mxu0 %v388
    %963 = vmatpush1.msra.mxu0 %v387
    %964 = vmatprep.subr.mxu0 %v392
    %965 = vmatpush1.msra.mxu0 %v391
    %966 = vmatprep.subr.mxu0 %v396
    %967 = vmatpush1.msra.mxu0 %v395
    %968 = vmatprep.subr.mxu0 %v400
    %969 = vmatpush1.msra.mxu0 %v399
    %970 = vmatprep.subr.mxu0 %v404
    %971 = vmatpush1.msra.mxu0 %v403
    %972 = vmatprep.subr.mxu0 %v408
    %973 = vmatpush1.msra.mxu0 %v407
    %974 = vmatprep.subr.mxu0 %v412
    %975 = vmatpush1.msra.mxu0 %v411
    %976 = vmatprep.subr.mxu0 %v416
    %977 = vmatpush1.msra.mxu0 %v415
    %978 = vmatprep.subr.mxu0 %v420
    %979 = vmatpush1.msra.mxu0 %v419
    %980 = vmatprep.subr.mxu0 0.0
    %981 = vmatpush1.msra.mxu0 0.0
    %982 = vmatprep.subr.mxu0 0.0
    %983 = vmatpush1.msra.mxu0 0.0
    %984 = vmatprep.subr.mxu0 0.0
    %985 = vmatpush1.msra.mxu0 0.0
    %986 = vmatprep.subr.mxu0 0.0
    %987 = vmatpush1.msra.mxu0 0.0
    %988 = vmatprep.subr.mxu0 0.0
    %989 = vmatpush1.msra.mxu0 0.0
    %990 = vmatprep.subr.mxu0 0.0
    %991 = vmatpush1.msra.mxu0 0.0
    %992 = vmatprep.subr.mxu0 0.0
    %993 = vmatpush1.msra.mxu0 0.0
    %994 = vmatprep.subr.mxu0 0.0
    %995 = vmatpush1.msra.mxu0 0.0
    %996 = vmatprep.subr.mxu0 0.0
    %997 = vmatpush1.msra.mxu0 0.0
    %998 = vmatprep.subr.mxu0 0.0
    %999 = vmatpush1.msra.mxu0 0.0
    %1000 = vmatprep.subr.mxu0 0.0
    %1001 = vmatpush1.msra.mxu0 0.0
    %1002 = vmatprep.subr.mxu0 0.0
    %1003 = vmatpush1.msra.mxu0 0.0
    %1004 = vmatprep.subr.mxu0 0.0
    %1005 = vmatpush1.msra.mxu0 0.0
    %1006 = vmatprep.subr.mxu0 0.0
    %1007 = vmatpush1.msra.mxu0 0.0
    %1008 = vmatprep.subr.mxu0 0.0
    %1009 = vmatpush1.msra.mxu0 0.0
    %1010 = vmatprep.subr.mxu0 0.0
    %1011 = vmatpush1.msra.mxu0 0.0
    %1012 = vmatprep.mubr.f32.mxu0 0.0
    %1013 = vmatmul.mubr.f32.gmra.mrb[0].mxu0 %v942
    %v1014 = vpop.f32.mrb[0].mxu0
    %v1015 = vadd.f32 0.0, %v1014
    %v1016 = vpop.f32.mrb[0].mxu0
    %v1017 = vadd.f32 0.0, %v1016
    %1018 = vdwg.mxu0
    %1019 = vmatprep.subr.mxu0 %v362
    %1020 = vmatpush1.msra.mxu0 %v361
    %1021 = vmatprep.subr.mxu0 %v366
    %1022 = vmatpush1.msra.mxu0 %v365
    %1023 = vmatprep.subr.mxu0 %v370
    %1024 = vmatpush1.msra.mxu0 %v369
    %1025 = vmatprep.subr.mxu0 %v374
    %1026 = vmatpush1.msra.mxu0 %v373
    %1027 = vmatprep.subr.mxu0 %v378
    %1028 = vmatpush1.msra.mxu0 %v377
    %1029 = vmatprep.subr.mxu0 %v382
    %1030 = vmatpush1.msra.mxu0 %v381
    %1031 = vmatprep.subr.mxu0 %v386
    %1032 = vmatpush1.msra.mxu0 %v385
    %1033 = vmatprep.subr.mxu0 %v390
    %1034 = vmatpush1.msra.mxu0 %v389
    %1035 = vmatprep.subr.mxu0 %v394
    %1036 = vmatpush1.msra.mxu0 %v393
    %1037 = vmatprep.subr.mxu0 %v398
    %1038 = vmatpush1.msra.mxu0 %v397
    %1039 = vmatprep.subr.mxu0 %v402
    %1040 = vmatpush1.msra.mxu0 %v401
    %1041 = vmatprep.subr.mxu0 %v406
    %1042 = vmatpush1.msra.mxu0 %v405
    %1043 = vmatprep.subr.mxu0 %v410
    %1044 = vmatpush1.msra.mxu0 %v409
    %1045 = vmatprep.subr.mxu0 %v414
    %1046 = vmatpush1.msra.mxu0 %v413
    %1047 = vmatprep.subr.mxu0 %v418
    %1048 = vmatpush1.msra.mxu0 %v417
    %1049 = vmatprep.subr.mxu0 %v422
    %1050 = vmatpush1.msra.mxu0 %v421
    %1051 = vmatprep.subr.mxu0 0.0
    %1052 = vmatpush1.msra.mxu0 0.0
    %1053 = vmatprep.subr.mxu0 0.0
    %1054 = vmatpush1.msra.mxu0 0.0
    %1055 = vmatprep.subr.mxu0 0.0
    %1056 = vmatpush1.msra.mxu0 0.0
    %1057 = vmatprep.subr.mxu0 0.0
    %1058 = vmatpush1.msra.mxu0 0.0
    %1059 = vmatprep.subr.mxu0 0.0
    %1060 = vmatpush1.msra.mxu0 0.0
    %1061 = vmatprep.subr.mxu0 0.0
    %1062 = vmatpush1.msra.mxu0 0.0
    %1063 = vmatprep.subr.mxu0 0.0
    %1064 = vmatpush1.msra.mxu0 0.0
    %1065 = vmatprep.subr.mxu0 0.0
    %1066 = vmatpush1.msra.mxu0 0.0
    %1067 = vmatprep.subr.mxu0 0.0
    %1068 = vmatpush1.msra.mxu0 0.0
    %1069 = vmatprep.subr.mxu0 0.0
    %1070 = vmatpush1.msra.mxu0 0.0
    %1071 = vmatprep.subr.mxu0 0.0
    %1072 = vmatpush1.msra.mxu0 0.0
    %1073 = vmatprep.subr.mxu0 0.0
    %1074 = vmatpush1.msra.mxu0 0.0
    %1075 = vmatprep.subr.mxu0 0.0
    %1076 = vmatpush1.msra.mxu0 0.0
    %1077 = vmatprep.subr.mxu0 0.0
    %1078 = vmatpush1.msra.mxu0 0.0
    %1079 = vmatprep.subr.mxu0 0.0
    %1080 = vmatpush1.msra.mxu0 0.0
    %1081 = vmatprep.subr.mxu0 0.0
    %1082 = vmatpush1.msra.mxu0 0.0
    %1083 = vmatprep.mubr.f32.mxu0 0.0
    %1084 = vmatmul.mubr.f32.gmra.mrb[0].mxu0 %v942
    %v1085 = vpop.f32.mrb[0].mxu0
    %v1086 = vadd.f32 0.0, %v1085
    %v1087 = vpop.f32.mrb[0].mxu0
    %v1088 = vadd.f32 0.0, %v1087
    %1089 = vdwg.mxu0
    %v1090 = vadd.f32 %v944, %v1015
    %v1091 = vadd.f32 %v945, %v1017
    %v1092 = vadd.f32 %v946, %v1086
    %v1093 = vadd.f32 %v947, %v1088
    %v1094 = vxor.u32 %v1090, 2147483648
    %v1095 = vmul.f32 %v1094, 1.442695
    %v1096 = vpow.pop %v1095
    %v1097 = vadd.f32 %v1096, 1.0
    %v1098 = vrcp.pop %v1097
    %v1099 = vmul.f32 1.0, %v1098
    %v1100 = vxor.u32 %v1091, 2147483648
    %v1101 = vmul.f32 %v1100, 1.442695
    %v1102 = vpow.pop %v1101
    %v1103 = vadd.f32 %v1102, 1.0
    %v1104 = vrcp.pop %v1103
    %v1105 = vmul.f32 1.0, %v1104
    %v1106 = vtanh.pop %v1092
    %v1107 = vxor.u32 %v1093, 2147483648
    %v1108 = vmul.f32 %v1107, 1.442695
    %v1109 = vpow.pop %v1108
    %v1110 = vadd.f32 %v1109, 1.0
    %v1111 = vrcp.pop %v1110
    %v1112 = vmul.f32 1.0, %v1111
    %v1113 = vmul.f32 %v1105, %v940
    %v1114 = vmul.f32 %v1099, %v1106
    %v1115 = vadd.f32 %v1113, %v1114
    %v1116 = vtanh.pop %v1115
    %v1117 = vmul.f32 %v1112, %v1116
    %s1118 = scalar_lea.vmem [#allocation2], 128
    %v1119 = vld [vmem:[%s1118] sm:$0xff]
    %v1120 = vld [vmem:[%s1118 + $0x8] sm:$0xff]
    %v1121 = vld [vmem:[%s1118 + $0x10] sm:$0xff]
    %v1122 = vld [vmem:[%s1118 + $0x18] sm:$0xff]
    %1123 = vmatprep.subr.mxu0 %v360
    %1124 = vmatpush1.msra.mxu0 %v359
    %1125 = vmatprep.subr.mxu0 %v364
    %1126 = vmatpush1.msra.mxu0 %v363
    %1127 = vmatprep.subr.mxu0 %v368
    %1128 = vmatpush1.msra.mxu0 %v367
    %1129 = vmatprep.subr.mxu0 %v372
    %1130 = vmatpush1.msra.mxu0 %v371
    %1131 = vmatprep.subr.mxu0 %v376
    %1132 = vmatpush1.msra.mxu0 %v375
    %1133 = vmatprep.subr.mxu0 %v380
    %1134 = vmatpush1.msra.mxu0 %v379
    %1135 = vmatprep.subr.mxu0 %v384
    %1136 = vmatpush1.msra.mxu0 %v383
    %1137 = vmatprep.subr.mxu0 %v388
    %1138 = vmatpush1.msra.mxu0 %v387
    %1139 = vmatprep.subr.mxu0 %v392
    %1140 = vmatpush1.msra.mxu0 %v391
    %1141 = vmatprep.subr.mxu0 %v396
    %1142 = vmatpush1.msra.mxu0 %v395
    %1143 = vmatprep.subr.mxu0 %v400
    %1144 = vmatpush1.msra.mxu0 %v399
    %1145 = vmatprep.subr.mxu0 %v404
    %1146 = vmatpush1.msra.mxu0 %v403
    %1147 = vmatprep.subr.mxu0 %v408
    %1148 = vmatpush1.msra.mxu0 %v407
    %1149 = vmatprep.subr.mxu0 %v412
    %1150 = vmatpush1.msra.mxu0 %v411
    %1151 = vmatprep.subr.mxu0 %v416
    %1152 = vmatpush1.msra.mxu0 %v415
    %1153 = vmatprep.subr.mxu0 %v420
    %1154 = vmatpush1.msra.mxu0 %v419
    %1155 = vmatprep.subr.mxu0 0.0
    %1156 = vmatpush1.msra.mxu0 0.0
    %1157 = vmatprep.subr.mxu0 0.0
    %1158 = vmatpush1.msra.mxu0 0.0
    %1159 = vmatprep.subr.mxu0 0.0
    %1160 = vmatpush1.msra.mxu0 0.0
    %1161 = vmatprep.subr.mxu0 0.0
    %1162 = vmatpush1.msra.mxu0 0.0
    %1163 = vmatprep.subr.mxu0 0.0
    %1164 = vmatpush1.msra.mxu0 0.0
    %1165 = vmatprep.subr.mxu0 0.0
    %1166 = vmatpush1.msra.mxu0 0.0
    %1167 = vmatprep.subr.mxu0 0.0
    %1168 = vmatpush1.msra.mxu0 0.0
    %1169 = vmatprep.subr.mxu0 0.0
    %1170 = vmatpush1.msra.mxu0 0.0
    %1171 = vmatprep.subr.mxu0 0.0
    %1172 = vmatpush1.msra.mxu0 0.0
    %1173 = vmatprep.subr.mxu0 0.0
    %1174 = vmatpush1.msra.mxu0 0.0
    %1175 = vmatprep.subr.mxu0 0.0
    %1176 = vmatpush1.msra.mxu0 0.0
    %1177 = vmatprep.subr.mxu0 0.0
    %1178 = vmatpush1.msra.mxu0 0.0
    %1179 = vmatprep.subr.mxu0 0.0
    %1180 = vmatpush1.msra.mxu0 0.0
    %1181 = vmatprep.subr.mxu0 0.0
    %1182 = vmatpush1.msra.mxu0 0.0
    %1183 = vmatprep.subr.mxu0 0.0
    %1184 = vmatpush1.msra.mxu0 0.0
    %1185 = vmatprep.subr.mxu0 0.0
    %1186 = vmatpush1.msra.mxu0 0.0
    %1187 = vmatprep.mubr.f32.mxu0 0.0
    %1188 = vmatmul.mubr.f32.gmra.mrb[0].mxu0 %v1117
    %v1189 = vpop.f32.mrb[0].mxu0
    %v1190 = vadd.f32 0.0, %v1189
    %v1191 = vpop.f32.mrb[0].mxu0
    %v1192 = vadd.f32 0.0, %v1191
    %1193 = vdwg.mxu0
    %1194 = vmatprep.subr.mxu0 %v362
    %1195 = vmatpush1.msra.mxu0 %v361
    %1196 = vmatprep.subr.mxu0 %v366
    %1197 = vmatpush1.msra.mxu0 %v365
    %1198 = vmatprep.subr.mxu0 %v370
    %1199 = vmatpush1.msra.mxu0 %v369
    %1200 = vmatprep.subr.mxu0 %v374
    %1201 = vmatpush1.msra.mxu0 %v373
    %1202 = vmatprep.subr.mxu0 %v378
    %1203 = vmatpush1.msra.mxu0 %v377
    %1204 = vmatprep.subr.mxu0 %v382
    %1205 = vmatpush1.msra.mxu0 %v381
    %1206 = vmatprep.subr.mxu0 %v386
    %1207 = vmatpush1.msra.mxu0 %v385
    %1208 = vmatprep.subr.mxu0 %v390
    %1209 = vmatpush1.msra.mxu0 %v389
    %1210 = vmatprep.subr.mxu0 %v394
    %1211 = vmatpush1.msra.mxu0 %v393
    %1212 = vmatprep.subr.mxu0 %v398
    %1213 = vmatpush1.msra.mxu0 %v397
    %1214 = vmatprep.subr.mxu0 %v402
    %1215 = vmatpush1.msra.mxu0 %v401
    %1216 = vmatprep.subr.mxu0 %v406
    %1217 = vmatpush1.msra.mxu0 %v405
    %1218 = vmatprep.subr.mxu0 %v410
    %1219 = vmatpush1.msra.mxu0 %v409
    %1220 = vmatprep.subr.mxu0 %v414
    %1221 = vmatpush1.msra.mxu0 %v413
    %1222 = vmatprep.subr.mxu0 %v418
    %1223 = vmatpush1.msra.mxu0 %v417
    %1224 = vmatprep.subr.mxu0 %v422
    %1225 = vmatpush1.msra.mxu0 %v421
    %1226 = vmatprep.subr.mxu0 0.0
    %1227 = vmatpush1.msra.mxu0 0.0
    %1228 = vmatprep.subr.mxu0 0.0
    %1229 = vmatpush1.msra.mxu0 0.0
    %1230 = vmatprep.subr.mxu0 0.0
    %1231 = vmatpush1.msra.mxu0 0.0
    %1232 = vmatprep.subr.mxu0 0.0
    %1233 = vmatpush1.msra.mxu0 0.0
    %1234 = vmatprep.subr.mxu0 0.0
    %1235 = vmatpush1.msra.mxu0 0.0
    %1236 = vmatprep.subr.mxu0 0.0
    %1237 = vmatpush1.msra.mxu0 0.0
    %1238 = vmatprep.subr.mxu0 0.0
    %1239 = vmatpush1.msra.mxu0 0.0
    %1240 = vmatprep.subr.mxu0 0.0
    %1241 = vmatpush1.msra.mxu0 0.0
    %1242 = vmatprep.subr.mxu0 0.0
    %1243 = vmatpush1.msra.mxu0 0.0
    %1244 = vmatprep.subr.mxu0 0.0
    %1245 = vmatpush1.msra.mxu0 0.0
    %1246 = vmatprep.subr.mxu0 0.0
    %1247 = vmatpush1.msra.mxu0 0.0
    %1248 = vmatprep.subr.mxu0 0.0
    %1249 = vmatpush1.msra.mxu0 0.0
    %1250 = vmatprep.subr.mxu0 0.0
    %1251 = vmatpush1.msra.mxu0 0.0
    %1252 = vmatprep.subr.mxu0 0.0
    %1253 = vmatpush1.msra.mxu0 0.0
    %1254 = vmatprep.subr.mxu0 0.0
    %1255 = vmatpush1.msra.mxu0 0.0
    %1256 = vmatprep.subr.mxu0 0.0
    %1257 = vmatpush1.msra.mxu0 0.0
    %1258 = vmatprep.mubr.f32.mxu0 0.0
    %1259 = vmatmul.mubr.f32.gmra.mrb[0].mxu0 %v1117
    %v1260 = vpop.f32.mrb[0].mxu0
    %v1261 = vadd.f32 0.0, %v1260
    %v1262 = vpop.f32.mrb[0].mxu0
    %v1263 = vadd.f32 0.0, %v1262
    %1264 = vdwg.mxu0
    %v1265 = vadd.f32 %v1119, %v1190
    %v1266 = vadd.f32 %v1120, %v1192
    %v1267 = vadd.f32 %v1121, %v1261
    %v1268 = vadd.f32 %v1122, %v1263
    %v1269 = vxor.u32 %v1265, 2147483648
    %v1270 = vmul.f32 %v1269, 1.442695
    %v1271 = vpow.pop %v1270
    %v1272 = vadd.f32 %v1271, 1.0
    %v1273 = vrcp.pop %v1272
    %v1274 = vmul.f32 1.0, %v1273
    %v1275 = vxor.u32 %v1266, 2147483648
    %v1276 = vmul.f32 %v1275, 1.442695
    %v1277 = vpow.pop %v1276
    %v1278 = vadd.f32 %v1277, 1.0
    %v1279 = vrcp.pop %v1278
    %v1280 = vmul.f32 1.0, %v1279
    %v1281 = vtanh.pop %v1267
    %v1282 = vxor.u32 %v1268, 2147483648
    %v1283 = vmul.f32 %v1282, 1.442695
    %v1284 = vpow.pop %v1283
    %v1285 = vadd.f32 %v1284, 1.0
    %v1286 = vrcp.pop %v1285
    %v1287 = vmul.f32 1.0, %v1286
    %v1288 = vmul.f32 %v1280, %v1115
    %v1289 = vmul.f32 %v1274, %v1281
    %v1290 = vadd.f32 %v1288, %v1289
    %v1291 = vtanh.pop %v1290
    %v1292 = vmul.f32 %v1287, %v1291
    %s1293 = scalar_lea.vmem [#allocation2], 160
    %v1294 = vld [vmem:[%s1293] sm:$0xff]
    %v1295 = vld [vmem:[%s1293 + $0x8] sm:$0xff]
    %v1296 = vld [vmem:[%s1293 + $0x10] sm:$0xff]
    %v1297 = vld [vmem:[%s1293 + $0x18] sm:$0xff]
    %1298 = vmatprep.subr.mxu0 %v360
    %1299 = vmatpush1.msra.mxu0 %v359
    %1300 = vmatprep.subr.mxu0 %v364
    %1301 = vmatpush1.msra.mxu0 %v363
    %1302 = vmatprep.subr.mxu0 %v368
    %1303 = vmatpush1.msra.mxu0 %v367
    %1304 = vmatprep.subr.mxu0 %v372
    %1305 = vmatpush1.msra.mxu0 %v371
    %1306 = vmatprep.subr.mxu0 %v376
    %1307 = vmatpush1.msra.mxu0 %v375
    %1308 = vmatprep.subr.mxu0 %v380
    %1309 = vmatpush1.msra.mxu0 %v379
    %1310 = vmatprep.subr.mxu0 %v384
    %1311 = vmatpush1.msra.mxu0 %v383
    %1312 = vmatprep.subr.mxu0 %v388
    %1313 = vmatpush1.msra.mxu0 %v387
    %1314 = vmatprep.subr.mxu0 %v392
    %1315 = vmatpush1.msra.mxu0 %v391
    %1316 = vmatprep.subr.mxu0 %v396
    %1317 = vmatpush1.msra.mxu0 %v395
    %1318 = vmatprep.subr.mxu0 %v400
    %1319 = vmatpush1.msra.mxu0 %v399
    %1320 = vmatprep.subr.mxu0 %v404
    %1321 = vmatpush1.msra.mxu0 %v403
    %1322 = vmatprep.subr.mxu0 %v408
    %1323 = vmatpush1.msra.mxu0 %v407
    %1324 = vmatprep.subr.mxu0 %v412
    %1325 = vmatpush1.msra.mxu0 %v411
    %1326 = vmatprep.subr.mxu0 %v416
    %1327 = vmatpush1.msra.mxu0 %v415
    %1328 = vmatprep.subr.mxu0 %v420
    %1329 = vmatpush1.msra.mxu0 %v419
    %1330 = vmatprep.subr.mxu0 0.0
    %1331 = vmatpush1.msra.mxu0 0.0
    %1332 = vmatprep.subr.mxu0 0.0
    %1333 = vmatpush1.msra.mxu0 0.0
    %1334 = vmatprep.subr.mxu0 0.0
    %1335 = vmatpush1.msra.mxu0 0.0
    %1336 = vmatprep.subr.mxu0 0.0
    %1337 = vmatpush1.msra.mxu0 0.0
    %1338 = vmatprep.subr.mxu0 0.0
    %1339 = vmatpush1.msra.mxu0 0.0
    %1340 = vmatprep.subr.mxu0 0.0
    %1341 = vmatpush1.msra.mxu0 0.0
    %1342 = vmatprep.subr.mxu0 0.0
    %1343 = vmatpush1.msra.mxu0 0.0
    %1344 = vmatprep.subr.mxu0 0.0
    %1345 = vmatpush1.msra.mxu0 0.0
    %1346 = vmatprep.subr.mxu0 0.0
    %1347 = vmatpush1.msra.mxu0 0.0
    %1348 = vmatprep.subr.mxu0 0.0
    %1349 = vmatpush1.msra.mxu0 0.0
    %1350 = vmatprep.subr.mxu0 0.0
    %1351 = vmatpush1.msra.mxu0 0.0
    %1352 = vmatprep.subr.mxu0 0.0
    %1353 = vmatpush1.msra.mxu0 0.0
    %1354 = vmatprep.subr.mxu0 0.0
    %1355 = vmatpush1.msra.mxu0 0.0
    %1356 = vmatprep.subr.mxu0 0.0
    %1357 = vmatpush1.msra.mxu0 0.0
    %1358 = vmatprep.subr.mxu0 0.0
    %1359 = vmatpush1.msra.mxu0 0.0
    %1360 = vmatprep.subr.mxu0 0.0
    %1361 = vmatpush1.msra.mxu0 0.0
    %1362 = vmatprep.mubr.f32.mxu0 0.0
    %1363 = vmatmul.mubr.f32.gmra.mrb[0].mxu0 %v1292
    %v1364 = vpop.f32.mrb[0].mxu0
    %v1365 = vadd.f32 0.0, %v1364
    %v1366 = vpop.f32.mrb[0].mxu0
    %v1367 = vadd.f32 0.0, %v1366
    %1368 = vdwg.mxu0
    %1369 = vmatprep.subr.mxu0 %v362
    %1370 = vmatpush1.msra.mxu0 %v361
    %1371 = vmatprep.subr.mxu0 %v366
    %1372 = vmatpush1.msra.mxu0 %v365
    %1373 = vmatprep.subr.mxu0 %v370
    %1374 = vmatpush1.msra.mxu0 %v369
    %1375 = vmatprep.subr.mxu0 %v374
    %1376 = vmatpush1.msra.mxu0 %v373
    %1377 = vmatprep.subr.mxu0 %v378
    %1378 = vmatpush1.msra.mxu0 %v377
    %1379 = vmatprep.subr.mxu0 %v382
    %1380 = vmatpush1.msra.mxu0 %v381
    %1381 = vmatprep.subr.mxu0 %v386
    %1382 = vmatpush1.msra.mxu0 %v385
    %1383 = vmatprep.subr.mxu0 %v390
    %1384 = vmatpush1.msra.mxu0 %v389
    %1385 = vmatprep.subr.mxu0 %v394
    %1386 = vmatpush1.msra.mxu0 %v393
    %1387 = vmatprep.subr.mxu0 %v398
    %1388 = vmatpush1.msra.mxu0 %v397
    %1389 = vmatprep.subr.mxu0 %v402
    %1390 = vmatpush1.msra.mxu0 %v401
    %1391 = vmatprep.subr.mxu0 %v406
    %1392 = vmatpush1.msra.mxu0 %v405
    %1393 = vmatprep.subr.mxu0 %v410
    %1394 = vmatpush1.msra.mxu0 %v409
    %1395 = vmatprep.subr.mxu0 %v414
    %1396 = vmatpush1.msra.mxu0 %v413
    %1397 = vmatprep.subr.mxu0 %v418
    %1398 = vmatpush1.msra.mxu0 %v417
    %1399 = vmatprep.subr.mxu0 %v422
    %1400 = vmatpush1.msra.mxu0 %v421
    %1401 = vmatprep.subr.mxu0 0.0
    %1402 = vmatpush1.msra.mxu0 0.0
    %1403 = vmatprep.subr.mxu0 0.0
    %1404 = vmatpush1.msra.mxu0 0.0
    %1405 = vmatprep.subr.mxu0 0.0
    %1406 = vmatpush1.msra.mxu0 0.0
    %1407 = vmatprep.subr.mxu0 0.0
    %1408 = vmatpush1.msra.mxu0 0.0
    %1409 = vmatprep.subr.mxu0 0.0
    %1410 = vmatpush1.msra.mxu0 0.0
    %1411 = vmatprep.subr.mxu0 0.0
    %1412 = vmatpush1.msra.mxu0 0.0
    %1413 = vmatprep.subr.mxu0 0.0
    %1414 = vmatpush1.msra.mxu0 0.0
    %1415 = vmatprep.subr.mxu0 0.0
    %1416 = vmatpush1.msra.mxu0 0.0
    %1417 = vmatprep.subr.mxu0 0.0
    %1418 = vmatpush1.msra.mxu0 0.0
    %1419 = vmatprep.subr.mxu0 0.0
    %1420 = vmatpush1.msra.mxu0 0.0
    %1421 = vmatprep.subr.mxu0 0.0
    %1422 = vmatpush1.msra.mxu0 0.0
    %1423 = vmatprep.subr.mxu0 0.0
    %1424 = vmatpush1.msra.mxu0 0.0
    %1425 = vmatprep.subr.mxu0 0.0
    %1426 = vmatpush1.msra.mxu0 0.0
    %1427 = vmatprep.subr.mxu0 0.0
    %1428 = vmatpush1.msra.mxu0 0.0
    %1429 = vmatprep.subr.mxu0 0.0
    %1430 = vmatpush1.msra.mxu0 0.0
    %1431 = vmatprep.subr.mxu0 0.0
    %1432 = vmatpush1.msra.mxu0 0.0
    %1433 = vmatprep.mubr.f32.mxu0 0.0
    %1434 = vmatmul.mubr.f32.gmra.mrb[0].mxu0 %v1292
    %v1435 = vpop.f32.mrb[0].mxu0
    %v1436 = vadd.f32 0.0, %v1435
    %v1437 = vpop.f32.mrb[0].mxu0
    %v1438 = vadd.f32 0.0, %v1437
    %1439 = vdwg.mxu0
    %v1440 = vadd.f32 %v1294, %v1365
    %v1441 = vadd.f32 %v1295, %v1367
    %v1442 = vadd.f32 %v1296, %v1436
    %v1443 = vadd.f32 %v1297, %v1438
    %v1444 = vxor.u32 %v1440, 2147483648
    %v1445 = vmul.f32 %v1444, 1.442695
    %v1446 = vpow.pop %v1445
    %v1447 = vadd.f32 %v1446, 1.0
    %v1448 = vrcp.pop %v1447
    %v1449 = vmul.f32 1.0, %v1448
    %v1450 = vxor.u32 %v1441, 2147483648
    %v1451 = vmul.f32 %v1450, 1.442695
    %v1452 = vpow.pop %v1451
    %v1453 = vadd.f32 %v1452, 1.0
    %v1454 = vrcp.pop %v1453
    %v1455 = vmul.f32 1.0, %v1454
    %v1456 = vtanh.pop %v1442
    %v1457 = vxor.u32 %v1443, 2147483648
    %v1458 = vmul.f32 %v1457, 1.442695
    %v1459 = vpow.pop %v1458
    %v1460 = vadd.f32 %v1459, 1.0
    %v1461 = vrcp.pop %v1460
    %v1462 = vmul.f32 1.0, %v1461
    %v1463 = vmul.f32 %v1455, %v1290
    %v1464 = vmul.f32 %v1449, %v1456
    %v1465 = vadd.f32 %v1463, %v1464
    %v1466 = vtanh.pop %v1465
    %v1467 = vmul.f32 %v1462, %v1466
    %s1468 = scalar_lea.vmem [#allocation2], 192
    %v1469 = vld [vmem:[%s1468] sm:$0xff]
    %v1470 = vld [vmem:[%s1468 + $0x8] sm:$0xff]
    %v1471 = vld [vmem:[%s1468 + $0x10] sm:$0xff]
    %v1472 = vld [vmem:[%s1468 + $0x18] sm:$0xff]
    %1473 = vmatprep.subr.mxu0 %v360
    %1474 = vmatpush1.msra.mxu0 %v359
    %1475 = vmatprep.subr.mxu0 %v364
    %1476 = vmatpush1.msra.mxu0 %v363
    %1477 = vmatprep.subr.mxu0 %v368
    %1478 = vmatpush1.msra.mxu0 %v367
    %1479 = vmatprep.subr.mxu0 %v372
    %1480 = vmatpush1.msra.mxu0 %v371
    %1481 = vmatprep.subr.mxu0 %v376
    %1482 = vmatpush1.msra.mxu0 %v375
    %1483 = vmatprep.subr.mxu0 %v380
    %1484 = vmatpush1.msra.mxu0 %v379
    %1485 = vmatprep.subr.mxu0 %v384
    %1486 = vmatpush1.msra.mxu0 %v383
    %1487 = vmatprep.subr.mxu0 %v388
    %1488 = vmatpush1.msra.mxu0 %v387
    %1489 = vmatprep.subr.mxu0 %v392
    %1490 = vmatpush1.msra.mxu0 %v391
    %1491 = vmatprep.subr.mxu0 %v396
    %1492 = vmatpush1.msra.mxu0 %v395
    %1493 = vmatprep.subr.mxu0 %v400
    %1494 = vmatpush1.msra.mxu0 %v399
    %1495 = vmatprep.subr.mxu0 %v404
    %1496 = vmatpush1.msra.mxu0 %v403
    %1497 = vmatprep.subr.mxu0 %v408
    %1498 = vmatpush1.msra.mxu0 %v407
    %1499 = vmatprep.subr.mxu0 %v412
    %1500 = vmatpush1.msra.mxu0 %v411
    %1501 = vmatprep.subr.mxu0 %v416
    %1502 = vmatpush1.msra.mxu0 %v415
    %1503 = vmatprep.subr.mxu0 %v420
    %1504 = vmatpush1.msra.mxu0 %v419
    %1505 = vmatprep.subr.mxu0 0.0
    %1506 = vmatpush1.msra.mxu0 0.0
    %1507 = vmatprep.subr.mxu0 0.0
    %1508 = vmatpush1.msra.mxu0 0.0
    %1509 = vmatprep.subr.mxu0 0.0
    %1510 = vmatpush1.msra.mxu0 0.0
    %1511 = vmatprep.subr.mxu0 0.0
    %1512 = vmatpush1.msra.mxu0 0.0
    %1513 = vmatprep.subr.mxu0 0.0
    %1514 = vmatpush1.msra.mxu0 0.0
    %1515 = vmatprep.subr.mxu0 0.0
    %1516 = vmatpush1.msra.mxu0 0.0
    %1517 = vmatprep.subr.mxu0 0.0
    %1518 = vmatpush1.msra.mxu0 0.0
    %1519 = vmatprep.subr.mxu0 0.0
    %1520 = vmatpush1.msra.mxu0 0.0
    %1521 = vmatprep.subr.mxu0 0.0
    %1522 = vmatpush1.msra.mxu0 0.0
    %1523 = vmatprep.subr.mxu0 0.0
    %1524 = vmatpush1.msra.mxu0 0.0
    %1525 = vmatprep.subr.mxu0 0.0
    %1526 = vmatpush1.msra.mxu0 0.0
    %1527 = vmatprep.subr.mxu0 0.0
    %1528 = vmatpush1.msra.mxu0 0.0
    %1529 = vmatprep.subr.mxu0 0.0
    %1530 = vmatpush1.msra.mxu0 0.0
    %1531 = vmatprep.subr.mxu0 0.0
    %1532 = vmatpush1.msra.mxu0 0.0
    %1533 = vmatprep.subr.mxu0 0.0
    %1534 = vmatpush1.msra.mxu0 0.0
    %1535 = vmatprep.subr.mxu0 0.0
    %1536 = vmatpush1.msra.mxu0 0.0
    %1537 = vmatprep.mubr.f32.mxu0 0.0
    %1538 = vmatmul.mubr.f32.gmra.mrb[0].mxu0 %v1467
    %v1539 = vpop.f32.mrb[0].mxu0
    %v1540 = vadd.f32 0.0, %v1539
    %v1541 = vpop.f32.mrb[0].mxu0
    %v1542 = vadd.f32 0.0, %v1541
    %1543 = vdwg.mxu0
    %1544 = vmatprep.subr.mxu0 %v362
    %1545 = vmatpush1.msra.mxu0 %v361
    %1546 = vmatprep.subr.mxu0 %v366
    %1547 = vmatpush1.msra.mxu0 %v365
    %1548 = vmatprep.subr.mxu0 %v370
    %1549 = vmatpush1.msra.mxu0 %v369
    %1550 = vmatprep.subr.mxu0 %v374
    %1551 = vmatpush1.msra.mxu0 %v373
    %1552 = vmatprep.subr.mxu0 %v378
    %1553 = vmatpush1.msra.mxu0 %v377
    %1554 = vmatprep.subr.mxu0 %v382
    %1555 = vmatpush1.msra.mxu0 %v381
    %1556 = vmatprep.subr.mxu0 %v386
    %1557 = vmatpush1.msra.mxu0 %v385
    %1558 = vmatprep.subr.mxu0 %v390
    %1559 = vmatpush1.msra.mxu0 %v389
    %1560 = vmatprep.subr.mxu0 %v394
    %1561 = vmatpush1.msra.mxu0 %v393
    %1562 = vmatprep.subr.mxu0 %v398
    %1563 = vmatpush1.msra.mxu0 %v397
    %1564 = vmatprep.subr.mxu0 %v402
    %1565 = vmatpush1.msra.mxu0 %v401
    %1566 = vmatprep.subr.mxu0 %v406
    %1567 = vmatpush1.msra.mxu0 %v405
    %1568 = vmatprep.subr.mxu0 %v410
    %1569 = vmatpush1.msra.mxu0 %v409
    %1570 = vmatprep.subr.mxu0 %v414
    %1571 = vmatpush1.msra.mxu0 %v413
    %1572 = vmatprep.subr.mxu0 %v418
    %1573 = vmatpush1.msra.mxu0 %v417
    %1574 = vmatprep.subr.mxu0 %v422
    %1575 = vmatpush1.msra.mxu0 %v421
    %1576 = vmatprep.subr.mxu0 0.0
    %1577 = vmatpush1.msra.mxu0 0.0
    %1578 = vmatprep.subr.mxu0 0.0
    %1579 = vmatpush1.msra.mxu0 0.0
    %1580 = vmatprep.subr.mxu0 0.0
    %1581 = vmatpush1.msra.mxu0 0.0
    %1582 = vmatprep.subr.mxu0 0.0
    %1583 = vmatpush1.msra.mxu0 0.0
    %1584 = vmatprep.subr.mxu0 0.0
    %1585 = vmatpush1.msra.mxu0 0.0
    %1586 = vmatprep.subr.mxu0 0.0
    %1587 = vmatpush1.msra.mxu0 0.0
    %1588 = vmatprep.subr.mxu0 0.0
    %1589 = vmatpush1.msra.mxu0 0.0
    %1590 = vmatprep.subr.mxu0 0.0
    %1591 = vmatpush1.msra.mxu0 0.0
    %1592 = vmatprep.subr.mxu0 0.0
    %1593 = vmatpush1.msra.mxu0 0.0
    %1594 = vmatprep.subr.mxu0 0.0
    %1595 = vmatpush1.msra.mxu0 0.0
    %1596 = vmatprep.subr.mxu0 0.0
    %1597 = vmatpush1.msra.mxu0 0.0
    %1598 = vmatprep.subr.mxu0 0.0
    %1599 = vmatpush1.msra.mxu0 0.0
    %1600 = vmatprep.subr.mxu0 0.0
    %1601 = vmatpush1.msra.mxu0 0.0
    %1602 = vmatprep.subr.mxu0 0.0
    %1603 = vmatpush1.msra.mxu0 0.0
    %1604 = vmatprep.subr.mxu0 0.0
    %1605 = vmatpush1.msra.mxu0 0.0
    %1606 = vmatprep.subr.mxu0 0.0
    %1607 = vmatpush1.msra.mxu0 0.0
    %1608 = vmatprep.mubr.f32.mxu0 0.0
    %1609 = vmatmul.mubr.f32.gmra.mrb[0].mxu0 %v1467
    %v1610 = vpop.f32.mrb[0].mxu0
    %v1611 = vadd.f32 0.0, %v1610
    %v1612 = vpop.f32.mrb[0].mxu0
    %v1613 = vadd.f32 0.0, %v1612
    %1614 = vdwg.mxu0
    %v1615 = vadd.f32 %v1469, %v1540
    %v1616 = vadd.f32 %v1470, %v1542
    %v1617 = vadd.f32 %v1471, %v1611
    %v1618 = vadd.f32 %v1472, %v1613
    %v1619 = vxor.u32 %v1615, 2147483648
    %v1620 = vmul.f32 %v1619, 1.442695
    %v1621 = vpow.pop %v1620
    %v1622 = vadd.f32 %v1621, 1.0
    %v1623 = vrcp.pop %v1622
    %v1624 = vmul.f32 1.0, %v1623
    %v1625 = vxor.u32 %v1616, 2147483648
    %v1626 = vmul.f32 %v1625, 1.442695
    %v1627 = vpow.pop %v1626
    %v1628 = vadd.f32 %v1627, 1.0
    %v1629 = vrcp.pop %v1628
    %v1630 = vmul.f32 1.0, %v1629
    %v1631 = vtanh.pop %v1617
    %v1632 = vxor.u32 %v1618, 2147483648
    %v1633 = vmul.f32 %v1632, 1.442695
    %v1634 = vpow.pop %v1633
    %v1635 = vadd.f32 %v1634, 1.0
    %v1636 = vrcp.pop %v1635
    %v1637 = vmul.f32 1.0, %v1636
    %v1638 = vmul.f32 %v1630, %v1465
    %v1639 = vmul.f32 %v1624, %v1631
    %v1640 = vadd.f32 %v1638, %v1639
    %v1641 = vtanh.pop %v1640
    %v1642 = vmul.f32 %v1637, %v1641
    %s1643 = scalar_lea.vmem [#allocation2], 224
    %v1644 = vld [vmem:[%s1643] sm:$0xff]
    %v1645 = vld [vmem:[%s1643 + $0x8] sm:$0xff]
    %v1646 = vld [vmem:[%s1643 + $0x10] sm:$0xff]
    %v1647 = vld [vmem:[%s1643 + $0x18] sm:$0xff]
    %1648 = vmatprep.subr.mxu0 %v360
    %1649 = vmatpush1.msra.mxu0 %v359
    %1650 = vmatprep.subr.mxu0 %v364
    %1651 = vmatpush1.msra.mxu0 %v363
    %1652 = vmatprep.subr.mxu0 %v368
    %1653 = vmatpush1.msra.mxu0 %v367
    %1654 = vmatprep.subr.mxu0 %v372
    %1655 = vmatpush1.msra.mxu0 %v371
    %1656 = vmatprep.subr.mxu0 %v376
    %1657 = vmatpush1.msra.mxu0 %v375
    %1658 = vmatprep.subr.mxu0 %v380
    %1659 = vmatpush1.msra.mxu0 %v379
    %1660 = vmatprep.subr.mxu0 %v384
    %1661 = vmatpush1.msra.mxu0 %v383
    %1662 = vmatprep.subr.mxu0 %v388
    %1663 = vmatpush1.msra.mxu0 %v387
    %1664 = vmatprep.subr.mxu0 %v392
    %1665 = vmatpush1.msra.mxu0 %v391
    %1666 = vmatprep.subr.mxu0 %v396
    %1667 = vmatpush1.msra.mxu0 %v395
    %1668 = vmatprep.subr.mxu0 %v400
    %1669 = vmatpush1.msra.mxu0 %v399
    %1670 = vmatprep.subr.mxu0 %v404
    %1671 = vmatpush1.msra.mxu0 %v403
    %1672 = vmatprep.subr.mxu0 %v408
    %1673 = vmatpush1.msra.mxu0 %v407
    %1674 = vmatprep.subr.mxu0 %v412
    %1675 = vmatpush1.msra.mxu0 %v411
    %1676 = vmatprep.subr.mxu0 %v416
    %1677 = vmatpush1.msra.mxu0 %v415
    %1678 = vmatprep.subr.mxu0 %v420
    %1679 = vmatpush1.msra.mxu0 %v419
    %1680 = vmatprep.subr.mxu0 0.0
    %1681 = vmatpush1.msra.mxu0 0.0
    %1682 = vmatprep.subr.mxu0 0.0
    %1683 = vmatpush1.msra.mxu0 0.0
    %1684 = vmatprep.subr.mxu0 0.0
    %1685 = vmatpush1.msra.mxu0 0.0
    %1686 = vmatprep.subr.mxu0 0.0
    %1687 = vmatpush1.msra.mxu0 0.0
    %1688 = vmatprep.subr.mxu0 0.0
    %1689 = vmatpush1.msra.mxu0 0.0
    %1690 = vmatprep.subr.mxu0 0.0
    %1691 = vmatpush1.msra.mxu0 0.0
    %1692 = vmatprep.subr.mxu0 0.0
    %1693 = vmatpush1.msra.mxu0 0.0
    %1694 = vmatprep.subr.mxu0 0.0
    %1695 = vmatpush1.msra.mxu0 0.0
    %1696 = vmatprep.subr.mxu0 0.0
    %1697 = vmatpush1.msra.mxu0 0.0
    %1698 = vmatprep.subr.mxu0 0.0
    %1699 = vmatpush1.msra.mxu0 0.0
    %1700 = vmatprep.subr.mxu0 0.0
    %1701 = vmatpush1.msra.mxu0 0.0
    %1702 = vmatprep.subr.mxu0 0.0
    %1703 = vmatpush1.msra.mxu0 0.0
    %1704 = vmatprep.subr.mxu0 0.0
    %1705 = vmatpush1.msra.mxu0 0.0
    %1706 = vmatprep.subr.mxu0 0.0
    %1707 = vmatpush1.msra.mxu0 0.0
    %1708 = vmatprep.subr.mxu0 0.0
    %1709 = vmatpush1.msra.mxu0 0.0
    %1710 = vmatprep.subr.mxu0 0.0
    %1711 = vmatpush1.msra.mxu0 0.0
    %1712 = vmatprep.mubr.f32.mxu0 0.0
    %1713 = vmatmul.mubr.f32.gmra.mrb[0].mxu0 %v1642
    %v1714 = vpop.f32.mrb[0].mxu0
    %v1715 = vadd.f32 0.0, %v1714
    %v1716 = vpop.f32.mrb[0].mxu0
    %v1717 = vadd.f32 0.0, %v1716
    %1718 = vdwg.mxu0
    %1719 = vmatprep.subr.mxu0 %v362
    %1720 = vmatpush1.msra.mxu0 %v361
    %1721 = vmatprep.subr.mxu0 %v366
    %1722 = vmatpush1.msra.mxu0 %v365
    %1723 = vmatprep.subr.mxu0 %v370
    %1724 = vmatpush1.msra.mxu0 %v369
    %1725 = vmatprep.subr.mxu0 %v374
    %1726 = vmatpush1.msra.mxu0 %v373
    %1727 = vmatprep.subr.mxu0 %v378
    %1728 = vmatpush1.msra.mxu0 %v377
    %1729 = vmatprep.subr.mxu0 %v382
    %1730 = vmatpush1.msra.mxu0 %v381
    %1731 = vmatprep.subr.mxu0 %v386
    %1732 = vmatpush1.msra.mxu0 %v385
    %1733 = vmatprep.subr.mxu0 %v390
    %1734 = vmatpush1.msra.mxu0 %v389
    %1735 = vmatprep.subr.mxu0 %v394
    %1736 = vmatpush1.msra.mxu0 %v393
    %1737 = vmatprep.subr.mxu0 %v398
    %1738 = vmatpush1.msra.mxu0 %v397
    %1739 = vmatprep.subr.mxu0 %v402
    %1740 = vmatpush1.msra.mxu0 %v401
    %1741 = vmatprep.subr.mxu0 %v406
    %1742 = vmatpush1.msra.mxu0 %v405
    %1743 = vmatprep.subr.mxu0 %v410
    %1744 = vmatpush1.msra.mxu0 %v409
    %1745 = vmatprep.subr.mxu0 %v414
    %1746 = vmatpush1.msra.mxu0 %v413
    %1747 = vmatprep.subr.mxu0 %v418
    %1748 = vmatpush1.msra.mxu0 %v417
    %1749 = vmatprep.subr.mxu0 %v422
    %1750 = vmatpush1.msra.mxu0 %v421
    %1751 = vmatprep.subr.mxu0 0.0
    %1752 = vmatpush1.msra.mxu0 0.0
    %1753 = vmatprep.subr.mxu0 0.0
    %1754 = vmatpush1.msra.mxu0 0.0
    %1755 = vmatprep.subr.mxu0 0.0
    %1756 = vmatpush1.msra.mxu0 0.0
    %1757 = vmatprep.subr.mxu0 0.0
    %1758 = vmatpush1.msra.mxu0 0.0
    %1759 = vmatprep.subr.mxu0 0.0
    %1760 = vmatpush1.msra.mxu0 0.0
    %1761 = vmatprep.subr.mxu0 0.0
    %1762 = vmatpush1.msra.mxu0 0.0
    %1763 = vmatprep.subr.mxu0 0.0
    %1764 = vmatpush1.msra.mxu0 0.0
    %1765 = vmatprep.subr.mxu0 0.0
    %1766 = vmatpush1.msra.mxu0 0.0
    %1767 = vmatprep.subr.mxu0 0.0
    %1768 = vmatpush1.msra.mxu0 0.0
    %1769 = vmatprep.subr.mxu0 0.0
    %1770 = vmatpush1.msra.mxu0 0.0
    %1771 = vmatprep.subr.mxu0 0.0
    %1772 = vmatpush1.msra.mxu0 0.0
    %1773 = vmatprep.subr.mxu0 0.0
    %1774 = vmatpush1.msra.mxu0 0.0
    %1775 = vmatprep.subr.mxu0 0.0
    %1776 = vmatpush1.msra.mxu0 0.0
    %1777 = vmatprep.subr.mxu0 0.0
    %1778 = vmatpush1.msra.mxu0 0.0
    %1779 = vmatprep.subr.mxu0 0.0
    %1780 = vmatpush1.msra.mxu0 0.0
    %1781 = vmatprep.subr.mxu0 0.0
    %1782 = vmatpush1.msra.mxu0 0.0
    %1783 = vmatprep.mubr.f32.mxu0 0.0
    %1784 = vmatmul.mubr.f32.gmra.mrb[0].mxu0 %v1642
    %v1785 = vpop.f32.mrb[0].mxu0
    %v1786 = vadd.f32 0.0, %v1785
    %v1787 = vpop.f32.mrb[0].mxu0
    %v1788 = vadd.f32 0.0, %v1787
    %1789 = vdwg.mxu0
    %v1790 = vadd.f32 %v1644, %v1715
    %v1791 = vadd.f32 %v1645, %v1717
    %v1792 = vadd.f32 %v1646, %v1786
    %v1793 = vadd.f32 %v1647, %v1788
    %v1794 = vxor.u32 %v1790, 2147483648
    %v1795 = vmul.f32 %v1794, 1.442695
    %v1796 = vpow.pop %v1795
    %v1797 = vadd.f32 %v1796, 1.0
    %v1798 = vrcp.pop %v1797
    %v1799 = vmul.f32 1.0, %v1798
    %v1800 = vxor.u32 %v1791, 2147483648
    %v1801 = vmul.f32 %v1800, 1.442695
    %v1802 = vpow.pop %v1801
    %v1803 = vadd.f32 %v1802, 1.0
    %v1804 = vrcp.pop %v1803
    %v1805 = vmul.f32 1.0, %v1804
    %v1806 = vtanh.pop %v1792
    %v1807 = vxor.u32 %v1793, 2147483648
    %v1808 = vmul.f32 %v1807, 1.442695
    %v1809 = vpow.pop %v1808
    %v1810 = vadd.f32 %v1809, 1.0
    %v1811 = vrcp.pop %v1810
    %v1812 = vmul.f32 1.0, %v1811
    %v1813 = vmul.f32 %v1805, %v1640
    %v1814 = vmul.f32 %v1799, %v1806
    %v1815 = vadd.f32 %v1813, %v1814
    %v1816 = vtanh.pop %v1815
    %v1817 = vmul.f32 %v1812, %v1816
    %v1818 = vld [vmem:[%s4] sm:$0x1]
    %v1820 = vlaneseq
    %v1821 = vshrl.u32 %v1820, 7
    %v1822 = vsub.s32 0, %v1821
    %v1823 = vrot.slane %v1818, %v1822
    %v1825 = vmul.f32 %v1817, %v1823
    %1826 = vadd.xlane.f32.xlu0 %v1825
    %v1827 = vpop.xlane.xlu0 %1826
    %s1828 = sld [smem:[#allocation3]]
    %v1829 = vstv %s1828
    %v1830 = vadd.f32 %v1827, %v1829
    %vm1831 = vcmask 7168
    %1832 = vst.msk [vmem:[%s6] sm:$0xff] %vm1831, %v1830
    // Predicated region
    $region30: #{tpu_custom_call.1} parent=1 // pred_check
      _
    $region31: #{tpu_custom_call.1} parent=1 // pred_check_branch
      %1834 = sbr.rel (0) target = $region33
    $region32: #{tpu_custom_call.1} parent=1 // pred_region
      _
    $region33: #{tpu_custom_call.1} parent=1 // pred_fallthru
      _
    // Predicated region
    $region34: #{tpu_custom_call.1} parent=1 // pred_check
      _
    $region35: #{tpu_custom_call.1} parent=1 // pred_check_branch
      %1836 = sbr.rel (0) target = $region37
    $region36: #{tpu_custom_call.1} parent=1 // pred_region
      _
    $region37: #{tpu_custom_call.1} parent=1 // pred_fallthru
      _
    %1837 = vsyncpa [#allocation5], 1

</llo_original>
